<compile_context>
chip_gen: v7x
topology: tpu7x:2x2x1
jax: 0.10.0
libtpu: 0.0.40
codegen_flags: <defaults>
</compile_context>

<pallas_src>
import functools
import math

import jax
import jax.numpy as jnp
from jax.experimental import pallas as pl
from jax.experimental.pallas import tpu as pltpu


def _ir_dim(l):
    return 2 * l + 1


def build_head_slices(irreps_head, num_heads):
    """Static column-permutation metadata (setup-time Python, not hot path).

    Returns (slices, d_mid, head_dim):
      slices   -- tuple of (start, end) input-column ranges in the order they
                  appear in the flat [N, num_heads*head_dim] output
                  (head-major, then irrep block), matching torch's
                  narrow -> reshape(N, H, -1) -> cat(dim=2).
      d_mid    -- irreps_mid_in.dim  (flat input width)
      head_dim -- irreps_head.dim    (flat per-head output width)
    """
    blocks = []            # (block_start_in_input, per_head_width)
    start = 0
    head_dim = 0
    for mul, l in irreps_head:
        per_head = mul * _ir_dim(l)
        blocks.append((start, per_head))
        start += num_heads * per_head
        head_dim += per_head
    d_mid = start

    slices = []
    for h in range(num_heads):
        for blk_start, per_head in blocks:
            s = blk_start + h * per_head
            slices.append((s, s + per_head))
    return tuple(slices), d_mid, head_dim


def _coalesce(slices):
    """Merge ranges that are adjacent in both output order and input columns."""
    merged = []
    for s, e in slices:
        if merged and merged[-1][1] == s:
            merged[-1] = (merged[-1][0], e)
        else:
            merged.append((s, e))
    return tuple((s, e) for s, e in merged)


def _fold_slices(base_slices, d_mid, fold):
    """Replicate the per-row permutation for `fold` logical rows packed into
    one lane-dense physical row, then coalesce adjacent ranges."""
    out = []
    for j in range(fold):
        off = j * d_mid
        for s, e in base_slices:
            out.append((s + off, e + off))
    return _coalesce(out)


def _choose_row_tile(n_rows, max_tile):
    """Pick a row tile that divides n_rows, is a multiple of 8 (or the full
    extent), fits <= max_tile, and keeps >=2 grid steps when possible so the
    parallel grid axis can use both v7x TensorCores."""
    if n_rows <= max_tile:
        if n_rows % 16 == 0:
            return n_rows // 2          # two parallel steps, still 8-aligned
        return n_rows                   # full extent, single step
    best = None
    for t in range(8, max_tile + 1, 8):
        if n_rows % t == 0:
            best = t
    if best is None:
        return n_rows                   # awkward N: single full-extent block
    return best


def vec2heads_kernel(x_ref, o_ref, *, col_slices):
    """Zero-FLOP static lane permutation of one lane-dense row slab."""
    x = x_ref[...]                                      # (tile_rows, width)
    cols = [x[:, s:e] for (s, e) in col_slices]         # static lane slices
    o_ref[...] = jnp.concatenate(cols, axis=-1).astype(o_ref.dtype)


def vec2attn_heads_pallas(x, irreps_head, num_heads, *,
                          max_row_tile=1024, donate_input=False):
    n, d_in = x.shape
    base_slices, d_mid, head_dim = build_head_slices(irreps_head, num_heads)
    assert d_in == d_mid, f"expected input width {d_mid}, got {d_in}"

    # Row-fold so the lane width becomes a multiple of 128 (unmasked vld/vst,
    # fully-occupied vregs).  Fall back to the unfolded layout for awkward N.
    fold = math.lcm(d_mid, 128) // d_mid
    if fold > 1 and n % fold != 0:
        fold = 1
    n_f = n // fold
    width = fold * d_mid
    col_slices = _fold_slices(base_slices, d_mid, fold)

    tile_rows = _choose_row_tile(n_f, max_row_tile)
    grid = (n_f // tile_rows,)

    x_folded = x.reshape(n_f, width)     # free, contiguous row-major view
    kernel = functools.partial(vec2heads_kernel, col_slices=col_slices)

    call_kwargs = {}
    if donate_input:
        # Same shape/dtype as the (folded) input; row-local permutation, each
        # tile is fully loaded into vregs before the store, so aliasing is safe.
        call_kwargs["input_output_aliases"] = {0: 0}

    out_flat = pl.pallas_call(
        kernel,
        out_shape=jax.ShapeDtypeStruct((n_f, width), x.dtype),
        grid=grid,
        in_specs=[pl.BlockSpec((tile_rows, width), lambda i: (i, 0))],
        out_specs=pl.BlockSpec((tile_rows, width), lambda i: (i, 0)),
        compiler_params=pltpu.CompilerParams(
            dimension_semantics=("parallel",)),
        cost_estimate=pl.CostEstimate(
            flops=0, transcendentals=0,
            bytes_accessed=2 * n * d_mid * x.dtype.itemsize),
        **call_kwargs,
    )(x_folded)

    # Trailing-dim reshapes in the wrapper are pure layout plumbing
    # (contiguous, row-major); the kernel only touches lane-dense 2-D slabs.
    return out_flat.reshape(n, num_heads, head_dim)


def vec2attn_heads_ref(x, irreps_head, num_heads):
    """Pure-JAX reference mirroring the PyTorch forward exactly."""
    n = x.shape[0]
    out = []
    start = 0
    for mul, l in irreps_head:
        per_head = mul * _ir_dim(l)
        width = num_heads * per_head
        blk = x[:, start:start + width].reshape(n, num_heads, per_head)
        out.append(blk)
        start += width
    return jnp.concatenate(out, axis=2)


if __name__ == "__main__":
    # irreps_head = "8x0e + 4x1e", num_heads = 4 -> input width 80, head_dim 20
    IRREPS_HEAD = ((8, 0), (4, 1))
    NUM_HEADS = 4
    N = 1024            # folds to 128 lane-dense rows of width 640; grid = 2

    _, D_MID, HEAD_DIM = build_head_slices(IRREPS_HEAD, NUM_HEADS)

    key = jax.random.PRNGKey(0)
    x = jax.random.normal(key, (N, D_MID), jnp.float32)

    out = vec2attn_heads_pallas(x, IRREPS_HEAD, NUM_HEADS)
    jax.block_until_ready(out)

    ref = vec2attn_heads_ref(x, IRREPS_HEAD, NUM_HEADS)
    assert out.shape == (N, NUM_HEADS, HEAD_DIM)
    assert jnp.array_equal(out, ref), "mismatch vs reference"
    print("KERNEL_OK")
</pallas_src>

<mosaic_0001>
module attributes {stable_mosaic.version = 11 : i64} {
  func.func @vec2heads_kernel(%arg0: i32, %arg1: memref<64x640xf32, #tpu.memory_space<vmem>>, %arg2: memref<64x640xf32, #tpu.memory_space<vmem>>) attributes {dimension_semantics = [#tpu.dimension_semantics<parallel>], iteration_bounds = array<i64: 2>, scalar_prefetch = 0 : i64, scratch_operands = 0 : i64, tpu.core_type = #tpu.core_type<tc>, window_params = [{transform_indices = @transform_0, window_bounds = array<i64: 64, 640>}, {transform_indices = @transform_1, window_bounds = array<i64: 64, 640>}]} {
    %c0 = arith.constant 0 : index
    %c0_0 = arith.constant 0 : index
    %0 = vector.load %arg1[%c0, %c0_0] : memref<64x640xf32, #tpu.memory_space<vmem>>, vector<64x640xf32>
    %1 = vector.extract_strided_slice %0 {offsets = [0, 0], sizes = [64, 8], strides = [1, 1]} : vector<64x640xf32> to vector<64x8xf32>
    %2 = vector.extract_strided_slice %0 {offsets = [0, 32], sizes = [64, 12], strides = [1, 1]} : vector<64x640xf32> to vector<64x12xf32>
    %3 = vector.extract_strided_slice %0 {offsets = [0, 8], sizes = [64, 8], strides = [1, 1]} : vector<64x640xf32> to vector<64x8xf32>
    %4 = vector.extract_strided_slice %0 {offsets = [0, 44], sizes = [64, 12], strides = [1, 1]} : vector<64x640xf32> to vector<64x12xf32>
    %5 = vector.extract_strided_slice %0 {offsets = [0, 16], sizes = [64, 8], strides = [1, 1]} : vector<64x640xf32> to vector<64x8xf32>
    %6 = vector.extract_strided_slice %0 {offsets = [0, 56], sizes = [64, 12], strides = [1, 1]} : vector<64x640xf32> to vector<64x12xf32>
    %7 = vector.extract_strided_slice %0 {offsets = [0, 24], sizes = [64, 8], strides = [1, 1]} : vector<64x640xf32> to vector<64x8xf32>
    %8 = vector.extract_strided_slice %0 {offsets = [0, 68], sizes = [64, 20], strides = [1, 1]} : vector<64x640xf32> to vector<64x20xf32>
    %9 = vector.extract_strided_slice %0 {offsets = [0, 112], sizes = [64, 12], strides = [1, 1]} : vector<64x640xf32> to vector<64x12xf32>
    %10 = vector.extract_strided_slice %0 {offsets = [0, 88], sizes = [64, 8], strides = [1, 1]} : vector<64x640xf32> to vector<64x8xf32>
    %11 = vector.extract_strided_slice %0 {offsets = [0, 124], sizes = [64, 12], strides = [1, 1]} : vector<64x640xf32> to vector<64x12xf32>
    %12 = vector.extract_strided_slice %0 {offsets = [0, 96], sizes = [64, 8], strides = [1, 1]} : vector<64x640xf32> to vector<64x8xf32>
    %13 = vector.extract_strided_slice %0 {offsets = [0, 136], sizes = [64, 12], strides = [1, 1]} : vector<64x640xf32> to vector<64x12xf32>
    %14 = vector.extract_strided_slice %0 {offsets = [0, 104], sizes = [64, 8], strides = [1, 1]} : vector<64x640xf32> to vector<64x8xf32>
    %15 = vector.extract_strided_slice %0 {offsets = [0, 148], sizes = [64, 20], strides = [1, 1]} : vector<64x640xf32> to vector<64x20xf32>
    %16 = vector.extract_strided_slice %0 {offsets = [0, 192], sizes = [64, 12], strides = [1, 1]} : vector<64x640xf32> to vector<64x12xf32>
    %17 = vector.extract_strided_slice %0 {offsets = [0, 168], sizes = [64, 8], strides = [1, 1]} : vector<64x640xf32> to vector<64x8xf32>
    %18 = vector.extract_strided_slice %0 {offsets = [0, 204], sizes = [64, 12], strides = [1, 1]} : vector<64x640xf32> to vector<64x12xf32>
    %19 = vector.extract_strided_slice %0 {offsets = [0, 176], sizes = [64, 8], strides = [1, 1]} : vector<64x640xf32> to vector<64x8xf32>
    %20 = vector.extract_strided_slice %0 {offsets = [0, 216], sizes = [64, 12], strides = [1, 1]} : vector<64x640xf32> to vector<64x12xf32>
    %21 = vector.extract_strided_slice %0 {offsets = [0, 184], sizes = [64, 8], strides = [1, 1]} : vector<64x640xf32> to vector<64x8xf32>
    %22 = vector.extract_strided_slice %0 {offsets = [0, 228], sizes = [64, 20], strides = [1, 1]} : vector<64x640xf32> to vector<64x20xf32>
    %23 = vector.extract_strided_slice %0 {offsets = [0, 272], sizes = [64, 12], strides = [1, 1]} : vector<64x640xf32> to vector<64x12xf32>
    %24 = vector.extract_strided_slice %0 {offsets = [0, 248], sizes = [64, 8], strides = [1, 1]} : vector<64x640xf32> to vector<64x8xf32>
    %25 = vector.extract_strided_slice %0 {offsets = [0, 284], sizes = [64, 12], strides = [1, 1]} : vector<64x640xf32> to vector<64x12xf32>
    %26 = vector.extract_strided_slice %0 {offsets = [0, 256], sizes = [64, 8], strides = [1, 1]} : vector<64x640xf32> to vector<64x8xf32>
    %27 = vector.extract_strided_slice %0 {offsets = [0, 296], sizes = [64, 12], strides = [1, 1]} : vector<64x640xf32> to vector<64x12xf32>
    %28 = vector.extract_strided_slice %0 {offsets = [0, 264], sizes = [64, 8], strides = [1, 1]} : vector<64x640xf32> to vector<64x8xf32>
    %29 = vector.extract_strided_slice %0 {offsets = [0, 308], sizes = [64, 20], strides = [1, 1]} : vector<64x640xf32> to vector<64x20xf32>
    %30 = vector.extract_strided_slice %0 {offsets = [0, 352], sizes = [64, 12], strides = [1, 1]} : vector<64x640xf32> to vector<64x12xf32>
    %31 = vector.extract_strided_slice %0 {offsets = [0, 328], sizes = [64, 8], strides = [1, 1]} : vector<64x640xf32> to vector<64x8xf32>
    %32 = vector.extract_strided_slice %0 {offsets = [0, 364], sizes = [64, 12], strides = [1, 1]} : vector<64x640xf32> to vector<64x12xf32>
    %33 = vector.extract_strided_slice %0 {offsets = [0, 336], sizes = [64, 8], strides = [1, 1]} : vector<64x640xf32> to vector<64x8xf32>
    %34 = vector.extract_strided_slice %0 {offsets = [0, 376], sizes = [64, 12], strides = [1, 1]} : vector<64x640xf32> to vector<64x12xf32>
    %35 = vector.extract_strided_slice %0 {offsets = [0, 344], sizes = [64, 8], strides = [1, 1]} : vector<64x640xf32> to vector<64x8xf32>
    %36 = vector.extract_strided_slice %0 {offsets = [0, 388], sizes = [64, 20], strides = [1, 1]} : vector<64x640xf32> to vector<64x20xf32>
    %37 = vector.extract_strided_slice %0 {offsets = [0, 432], sizes = [64, 12], strides = [1, 1]} : vector<64x640xf32> to vector<64x12xf32>
    %38 = vector.extract_strided_slice %0 {offsets = [0, 408], sizes = [64, 8], strides = [1, 1]} : vector<64x640xf32> to vector<64x8xf32>
    %39 = vector.extract_strided_slice %0 {offsets = [0, 444], sizes = [64, 12], strides = [1, 1]} : vector<64x640xf32> to vector<64x12xf32>
    %40 = vector.extract_strided_slice %0 {offsets = [0, 416], sizes = [64, 8], strides = [1, 1]} : vector<64x640xf32> to vector<64x8xf32>
    %41 = vector.extract_strided_slice %0 {offsets = [0, 456], sizes = [64, 12], strides = [1, 1]} : vector<64x640xf32> to vector<64x12xf32>
    %42 = vector.extract_strided_slice %0 {offsets = [0, 424], sizes = [64, 8], strides = [1, 1]} : vector<64x640xf32> to vector<64x8xf32>
    %43 = vector.extract_strided_slice %0 {offsets = [0, 468], sizes = [64, 20], strides = [1, 1]} : vector<64x640xf32> to vector<64x20xf32>
    %44 = vector.extract_strided_slice %0 {offsets = [0, 512], sizes = [64, 12], strides = [1, 1]} : vector<64x640xf32> to vector<64x12xf32>
    %45 = vector.extract_strided_slice %0 {offsets = [0, 488], sizes = [64, 8], strides = [1, 1]} : vector<64x640xf32> to vector<64x8xf32>
    %46 = vector.extract_strided_slice %0 {offsets = [0, 524], sizes = [64, 12], strides = [1, 1]} : vector<64x640xf32> to vector<64x12xf32>
    %47 = vector.extract_strided_slice %0 {offsets = [0, 496], sizes = [64, 8], strides = [1, 1]} : vector<64x640xf32> to vector<64x8xf32>
    %48 = vector.extract_strided_slice %0 {offsets = [0, 536], sizes = [64, 12], strides = [1, 1]} : vector<64x640xf32> to vector<64x12xf32>
    %49 = vector.extract_strided_slice %0 {offsets = [0, 504], sizes = [64, 8], strides = [1, 1]} : vector<64x640xf32> to vector<64x8xf32>
    %50 = vector.extract_strided_slice %0 {offsets = [0, 548], sizes = [64, 20], strides = [1, 1]} : vector<64x640xf32> to vector<64x20xf32>
    %51 = vector.extract_strided_slice %0 {offsets = [0, 592], sizes = [64, 12], strides = [1, 1]} : vector<64x640xf32> to vector<64x12xf32>
    %52 = vector.extract_strided_slice %0 {offsets = [0, 568], sizes = [64, 8], strides = [1, 1]} : vector<64x640xf32> to vector<64x8xf32>
    %53 = vector.extract_strided_slice %0 {offsets = [0, 604], sizes = [64, 12], strides = [1, 1]} : vector<64x640xf32> to vector<64x12xf32>
    %54 = vector.extract_strided_slice %0 {offsets = [0, 576], sizes = [64, 8], strides = [1, 1]} : vector<64x640xf32> to vector<64x8xf32>
    %55 = vector.extract_strided_slice %0 {offsets = [0, 616], sizes = [64, 12], strides = [1, 1]} : vector<64x640xf32> to vector<64x12xf32>
    %56 = vector.extract_strided_slice %0 {offsets = [0, 584], sizes = [64, 8], strides = [1, 1]} : vector<64x640xf32> to vector<64x8xf32>
    %57 = vector.extract_strided_slice %0 {offsets = [0, 628], sizes = [64, 12], strides = [1, 1]} : vector<64x640xf32> to vector<64x12xf32>
    %58 = tpu.concatenate %1, %2, %3, %4, %5, %6, %7, %8, %9, %10, %11, %12, %13, %14, %15, %16 in 1 : vector<64x8xf32>, vector<64x12xf32>, vector<64x8xf32>, vector<64x12xf32>, vector<64x8xf32>, vector<64x12xf32>, vector<64x8xf32>, vector<64x20xf32>, vector<64x12xf32>, vector<64x8xf32>, vector<64x12xf32>, vector<64x8xf32>, vector<64x12xf32>, vector<64x8xf32>, vector<64x20xf32>, vector<64x12xf32> -> vector<64x180xf32>
    %59 = tpu.concatenate %17, %18, %19, %20, %21, %22, %23, %24, %25, %26, %27, %28, %29, %30, %31, %32 in 1 : vector<64x8xf32>, vector<64x12xf32>, vector<64x8xf32>, vector<64x12xf32>, vector<64x8xf32>, vector<64x20xf32>, vector<64x12xf32>, vector<64x8xf32>, vector<64x12xf32>, vector<64x8xf32>, vector<64x12xf32>, vector<64x8xf32>, vector<64x20xf32>, vector<64x12xf32>, vector<64x8xf32>, vector<64x12xf32> -> vector<64x180xf32>
    %60 = tpu.concatenate %33, %34, %35, %36, %37, %38, %39, %40, %41, %42, %43, %44, %45, %46, %47, %48 in 1 : vector<64x8xf32>, vector<64x12xf32>, vector<64x8xf32>, vector<64x20xf32>, vector<64x12xf32>, vector<64x8xf32>, vector<64x12xf32>, vector<64x8xf32>, vector<64x12xf32>, vector<64x8xf32>, vector<64x20xf32>, vector<64x12xf32>, vector<64x8xf32>, vector<64x12xf32>, vector<64x8xf32>, vector<64x12xf32> -> vector<64x180xf32>
    %61 = tpu.concatenate %49, %50, %51, %52, %53, %54, %55, %56, %57 in 1 : vector<64x8xf32>, vector<64x20xf32>, vector<64x12xf32>, vector<64x8xf32>, vector<64x12xf32>, vector<64x8xf32>, vector<64x12xf32>, vector<64x8xf32>, vector<64x12xf32> -> vector<64x100xf32>
    %62 = tpu.concatenate %58, %59, %60, %61 in 1 : vector<64x180xf32>, vector<64x180xf32>, vector<64x180xf32>, vector<64x100xf32> -> vector<64x640xf32>
    %c0_1 = arith.constant 0 : index
    %c0_2 = arith.constant 0 : index
    %63 = vector.load %arg2[%c0_1, %c0_2] : memref<64x640xf32, #tpu.memory_space<vmem>>, vector<64x640xf32>
    tpu.vector_store %arg2[%c0_1, %c0_2], %62 {strides = array<i32>} : memref<64x640xf32, #tpu.memory_space<vmem>>, vector<64x640xf32>,
    return
  }
  func.func @transform_0(%arg0: i32) -> (i32, i32) {
    %c0_i32 = arith.constant 0 : i32
    %c0_i32_0 = arith.constant 0 : i32
    return %arg0, %c0_i32 : i32, i32
  }
  func.func @transform_1(%arg0: i32) -> (i32, i32) {
    %c0_i32 = arith.constant 0 : i32
    %c0_i32_0 = arith.constant 0 : i32
    return %arg0, %c0_i32 : i32, i32
  }
}

</mosaic_0001>

<llo_original>
// kernel: tpu_custom_call.1
$region0: #{tpu_custom_call.1}
  #allocation0 [shape = 'u32[]', space=smem, size = 0x4, offset = 0x4, fixed_abs, tag = 'smem constant byte address 0x4 - core index']
  #allocation1 [shape = 'u32[144,128]{1,0:T(1,128)}', space=vmem, size = 0x12000, scoped, tag = 'internal scratch']
  %s0 = inlined_call_operand.hbm [shape: f32[128,640], index: 0, kind: input, shape index: {}]
  %s1 = inlined_call_operand.hbm [shape: f32[128,640], index: 1, kind: output, shape index: {}]
  %s2 = sld [smem:[#allocation0]]
  $region41: #{tpu_custom_call.1} parent=0
    _
  %s4 = ssub.s32 1, %s2
  %s5 = scalar_select 0, %s4, %s2
  $region1: #{tpu_custom_call.1} parent=0
    #allocation2 [shape = 'u8[327680]{0}', space=vmem, size = 0x50000, scoped, tag = 'input window, operand 0']
    #allocation3 [shape = 's32[2]{0}', space=sflag, size = 0x8, scoped, tag = 'scoped memory for tpu_custom_call.1']
    #allocation4 [shape = 's32[2]{0}', space=sflag, size = 0x8, scoped, tag = 'scoped memory for tpu_custom_call.1']
    #allocation5 [shape = 'u8[327680]{0}', space=vmem, size = 0x50000, scoped, tag = 'output window, operand 0']
    %6 = vsyncpa [#allocation3], 0
    %s7 = scalar_lea.sflag [#allocation3], 1
    %8 = vsyncpa %s7, 0
    %9 = vsyncpa [#allocation4], 0
    %s10 = scalar_lea.sflag [#allocation4], 1
    %11 = vsyncpa %s10, 0
    loop: start=0, step=1, limit=4
    $region2: #{tpu_custom_call.1} parent=1 // loop_pre_header
      _
    $region3: #{tpu_custom_call.1} parent=1 // loop_header
      %s13 = sphi 0, %s17
      %p14 = scmp.ge.s32.totalorder %s13, 4
      %s23 = sphi 0, %s25
      %s26 = sphi 0, %s23
      %s27 = sphi 0, %s26
      %s43 = sphi 0, %s27
      %s49 = sphi 0, %s51
      %s52 = sphi 0, %s49
      %s53 = sphi 0, %s52
      %s69 = sphi 0, %s53
    $region4: #{tpu_custom_call.1} parent=1 // loop_header_branch
      %16 = sbr.rel (%p14) target = $region8
    $region5: #{tpu_custom_call.1} parent=1 // loop_body
      %s18 = ssub.s32 %s13, 1
      %s19 = ssub.s32 %s13, 2
      %s20 = sadd.s32 %s13, 1
      %s21 = ssub.s32 %s13, %s20
      %p22 = scmp.eq.s32.totalorder %s21, 0
      %s24 = sadd.s32 %s23, 1
      %s25 = scalar_select %p22, %s23, %s24
      %p28 = pneg %p22
      %p29 = scmp.eq.s32.totalorder %s13, 1
      %p30 = por %p28, %p29
      %p31 = scmp.ne.s32.totalorder %s23, %s26
      %p32 = scmp.eq.s32.totalorder %s13, 0
      %p33 = por %p31, %p32
      %p34 = scmp.ne.s32.totalorder %s23, %s26
      %p35 = scmp.eq.s32.totalorder %s18, 1
      %p36 = por %p34, %p35
      %p37 = scmp.ne.s32.totalorder %s26, %s27
      %p38 = scmp.eq.s32.totalorder %s18, 0
      %p39 = por %p37, %p38
      %p40 = scmp.ne.s32.totalorder %s26, %s27
      %p41 = scmp.eq.s32.totalorder %s19, 1
      %p42 = por %p40, %p41
      %p44 = scmp.ne.s32.totalorder %s27, %s43
      %p45 = scmp.eq.s32.totalorder %s19, 0
      %p46 = por %p44, %p45
      %s47 = ssub.s32 %s13, %s20
      %p48 = scmp.eq.s32.totalorder %s47, 0
      %s50 = sadd.s32 %s49, 1
      %s51 = scalar_select %p48, %s49, %s50
      %p54 = pneg %p48
      %p55 = scmp.eq.s32.totalorder %s13, 1
      %p56 = por %p54, %p55
      %p57 = scmp.ne.s32.totalorder %s49, %s52
      %p58 = scmp.eq.s32.totalorder %s13, 0
      %p59 = por %p57, %p58
      %p60 = scmp.ne.s32.totalorder %s49, %s52
      %p61 = scmp.eq.s32.totalorder %s18, 1
      %p62 = por %p60, %p61
      %p63 = scmp.ne.s32.totalorder %s52, %s53
      %p64 = scmp.eq.s32.totalorder %s18, 0
      %p65 = por %p63, %p64
      %p66 = scmp.ne.s32.totalorder %s52, %s53
      %p67 = scmp.eq.s32.totalorder %s19, 1
      %p68 = por %p66, %p67
      %p70 = scmp.ne.s32.totalorder %s53, %s69
      %p71 = scmp.eq.s32.totalorder %s19, 0
      %p72 = por %p70, %p71
      %p73 = scmp.le.s32.totalorder 1, %s13
      %p74 = scmp.lt.s32.totalorder %s13, 3
      %p75 = pnand %p73, %p74
      %p76 = pneg %p75
      // Predicated region
      $region9: #{tpu_custom_call.1} parent=5 // pred_check
        _
      $region10: #{tpu_custom_call.1} parent=5 // pred_check_branch
        %78 = sbr.rel (%p75) target = $region12
      $region11: #{tpu_custom_call.1} parent=5 // pred_region
        %s79 = ssub.s32 %s13, 1
      $region12: #{tpu_custom_call.1} parent=5 // pred_fallthru
        _
      %p80 = scmp.lt.s32.totalorder %s13, 2
      // Predicated region
      $region13: #{tpu_custom_call.1} parent=5 // pred_check
        %p81 = pneg %p80
      $region14: #{tpu_custom_call.1} parent=5 // pred_check_branch
        %83 = sbr.rel (%p81) target = $region16
      $region15: #{tpu_custom_call.1} parent=5 // pred_region
        // Predicated region
        $region17: #{tpu_custom_call.1} parent=15 // pred_check
          %p84 = pneg %p33
        $region18: #{tpu_custom_call.1} parent=15 // pred_check_branch
          %86 = sbr.rel (%p84) target = $region20
        $region19: #{tpu_custom_call.1} parent=15 // pred_region
          %s87 = sand.u32 %s23, 1
          %s88 = scalar_lea.sflag [#allocation3], %s87
          %s89 = sand.u32 %s23, 1
          %s90 = smul.addr %s89, 320
          %s91 = scalar_lea.vmem [#allocation2], %s90
          %s92 = smul.u32 8, %s13
          %s94 = ssub.s32 5120, 5120
          %95 = vsyncadd %s88, %s94
          %s96 = smul.addr %s92, 5
          %s97 = smul.addr %s96, 128
          %s98 = scalar_lea.hbm %s0, %s97
          %s99 = sshll.u32 %s91, 4
          %s100 = int_to_ptr.vmem [resolvable:$true] %s99
          %105 = dma.hbm_to_vmem [thread:$0]  %s98, 5120, %s100, %s88, 640, 640, 40
        $region20: #{tpu_custom_call.1} parent=15 // pred_fallthru
          _
      $region16: #{tpu_custom_call.1} parent=5 // pred_fallthru
        _
      %p106 = scmp.le.s32.totalorder 1, %s13
      %p107 = scmp.lt.s32.totalorder %s13, 3
      %p108 = pnand %p106, %p107
      %p109 = pneg %p108
      // Predicated region
      $region21: #{tpu_custom_call.1} parent=5 // pred_check
        _
      $region22: #{tpu_custom_call.1} parent=5 // pred_check_branch
        %111 = sbr.rel (%p108) target = $region24
      $region23: #{tpu_custom_call.1} parent=5 // pred_region
        %s112 = ssub.s32 %s13, 1
        %s113 = sand.u32 %s26, 1
        %s114 = scalar_lea.sflag [#allocation3], %s113
        %s115 = sand.u32 %s26, 1
        %s116 = smul.addr %s115, 320
        %s117 = scalar_lea.vmem [#allocation2], %s116
        // Predicated region
        $region25: #{tpu_custom_call.1} parent=23 // pred_check
          %p118 = pneg %p39
        $region26: #{tpu_custom_call.1} parent=23 // pred_check_branch
          %120 = sbr.rel (%p118) target = $region28
        $region27: #{tpu_custom_call.1} parent=23 // pred_region
          %121 = dma.done %s114, 5120
        $region28: #{tpu_custom_call.1} parent=23 // pred_fallthru
          _
        %s122 = sand.u32 %s26, 1
        %s123 = scalar_lea.sflag [#allocation3], %s122
        %s124 = sand.u32 %s26, 1
        %s125 = smul.addr %s124, 320
        %s126 = scalar_lea.vmem [#allocation2], %s125
        %p127 = pneg %p39
        %p128 = pneg %p36
        %p129 = pneg %p65
        %p130 = pneg %p62
        %s131 = sand.u32 %s52, 1
        %s132 = scalar_lea.sflag [#allocation4], %s131
        %s133 = sand.u32 %s52, 1
        %s134 = smul.addr %s133, 320
        %s135 = scalar_lea.vmem [#allocation5], %s134
        %s136 = smul.u32 8, %s18
        %s137 = smul.u32 8, %s18
        %v138 = vld [vmem:[%s117] sm:$0xff]
        %v139 = vld [vmem:[%s117 + $0x8] sm:$0xff]
        %v140 = vld [vmem:[%s117 + $0x10] sm:$0xff]
        %v141 = vld [vmem:[%s117 + $0x18] sm:$0xff]
        %v142 = vld [vmem:[%s117 + $0x20] sm:$0xff]
        %v143 = vld [vmem:[%s117 + $0x28] sm:$0xff]
        %v144 = vld [vmem:[%s117 + $0x30] sm:$0xff]
        %v145 = vld [vmem:[%s117 + $0x38] sm:$0xff]
        %v146 = vld [vmem:[%s117 + $0x40] sm:$0xff]
        %v147 = vld [vmem:[%s117 + $0x48] sm:$0xff]
        %v148 = vld [vmem:[%s117 + $0x50] sm:$0xff]
        %v149 = vld [vmem:[%s117 + $0x58] sm:$0xff]
        %v150 = vld [vmem:[%s117 + $0x60] sm:$0xff]
        %v151 = vld [vmem:[%s117 + $0x68] sm:$0xff]
        %v152 = vld [vmem:[%s117 + $0x70] sm:$0xff]
        %v153 = vld [vmem:[%s117 + $0x78] sm:$0xff]
        %v154 = vld [vmem:[%s117 + $0x80] sm:$0xff]
        %v155 = vld [vmem:[%s117 + $0x88] sm:$0xff]
        %v156 = vld [vmem:[%s117 + $0x90] sm:$0xff]
        %v157 = vld [vmem:[%s117 + $0x98] sm:$0xff]
        %v158 = vld [vmem:[%s117 + $0xa0] sm:$0xff]
        %v159 = vld [vmem:[%s117 + $0xa8] sm:$0xff]
        %v160 = vld [vmem:[%s117 + $0xb0] sm:$0xff]
        %v161 = vld [vmem:[%s117 + $0xb8] sm:$0xff]
        %v162 = vld [vmem:[%s117 + $0xc0] sm:$0xff]
        %v163 = vld [vmem:[%s117 + $0xc8] sm:$0xff]
        %v164 = vld [vmem:[%s117 + $0xd0] sm:$0xff]
        %v165 = vld [vmem:[%s117 + $0xd8] sm:$0xff]
        %v166 = vld [vmem:[%s117 + $0xe0] sm:$0xff]
        %v167 = vld [vmem:[%s117 + $0xe8] sm:$0xff]
        %v168 = vld [vmem:[%s117 + $0xf0] sm:$0xff]
        %v169 = vld [vmem:[%s117 + $0xf8] sm:$0xff]
        %v170 = vld [vmem:[%s117 + $0x100] sm:$0xff]
        %v171 = vld [vmem:[%s117 + $0x108] sm:$0xff]
        %v172 = vld [vmem:[%s117 + $0x110] sm:$0xff]
        %v173 = vld [vmem:[%s117 + $0x118] sm:$0xff]
        %v174 = vld [vmem:[%s117 + $0x120] sm:$0xff]
        %v175 = vld [vmem:[%s117 + $0x128] sm:$0xff]
        %v176 = vld [vmem:[%s117 + $0x130] sm:$0xff]
        %v177 = vld [vmem:[%s117 + $0x138] sm:$0xff]
        %186 = vrot.lane.b32.xlu0 %v138, 104
        %v187 = vpop.permute.xlu0 %186
        %188 = vrot.lane.b32.xlu0 %v143, 104
        %v189 = vpop.permute.xlu0 %188
        %190 = vrot.lane.b32.xlu0 %v148, 104
        %v191 = vpop.permute.xlu0 %190
        %192 = vrot.lane.b32.xlu0 %v153, 104
        %v193 = vpop.permute.xlu0 %192
        %194 = vrot.lane.b32.xlu0 %v158, 104
        %v195 = vpop.permute.xlu0 %194
        %196 = vrot.lane.b32.xlu0 %v163, 104
        %v197 = vpop.permute.xlu0 %196
        %198 = vrot.lane.b32.xlu0 %v168, 104
        %v199 = vpop.permute.xlu0 %198
        %200 = vrot.lane.b32.xlu0 %v173, 104
        %v201 = vpop.permute.xlu0 %200
        %210 = vrot.lane.b32.xlu0 %v138, 12
        %v211 = vpop.permute.xlu0 %210
        %212 = vrot.lane.b32.xlu0 %v143, 12
        %v213 = vpop.permute.xlu0 %212
        %214 = vrot.lane.b32.xlu0 %v148, 12
        %v215 = vpop.permute.xlu0 %214
        %216 = vrot.lane.b32.xlu0 %v153, 12
        %v217 = vpop.permute.xlu0 %216
        %218 = vrot.lane.b32.xlu0 %v158, 12
        %v219 = vpop.permute.xlu0 %218
        %220 = vrot.lane.b32.xlu0 %v163, 12
        %v221 = vpop.permute.xlu0 %220
        %222 = vrot.lane.b32.xlu0 %v168, 12
        %v223 = vpop.permute.xlu0 %222
        %224 = vrot.lane.b32.xlu0 %v173, 12
        %v225 = vpop.permute.xlu0 %224
        %234 = vrot.lane.b32.xlu0 %v138, 112
        %v235 = vpop.permute.xlu0 %234
        %236 = vrot.lane.b32.xlu0 %v143, 112
        %v237 = vpop.permute.xlu0 %236
        %238 = vrot.lane.b32.xlu0 %v148, 112
        %v239 = vpop.permute.xlu0 %238
        %240 = vrot.lane.b32.xlu0 %v153, 112
        %v241 = vpop.permute.xlu0 %240
        %242 = vrot.lane.b32.xlu0 %v158, 112
        %v243 = vpop.permute.xlu0 %242
        %244 = vrot.lane.b32.xlu0 %v163, 112
        %v245 = vpop.permute.xlu0 %244
        %246 = vrot.lane.b32.xlu0 %v168, 112
        %v247 = vpop.permute.xlu0 %246
        %248 = vrot.lane.b32.xlu0 %v173, 112
        %v249 = vpop.permute.xlu0 %248
        %258 = vrot.lane.b32.xlu0 %v138, 24
        %v259 = vpop.permute.xlu0 %258
        %260 = vrot.lane.b32.xlu0 %v143, 24
        %v261 = vpop.permute.xlu0 %260
        %262 = vrot.lane.b32.xlu0 %v148, 24
        %v263 = vpop.permute.xlu0 %262
        %264 = vrot.lane.b32.xlu0 %v153, 24
        %v265 = vpop.permute.xlu0 %264
        %266 = vrot.lane.b32.xlu0 %v158, 24
        %v267 = vpop.permute.xlu0 %266
        %268 = vrot.lane.b32.xlu0 %v163, 24
        %v269 = vpop.permute.xlu0 %268
        %270 = vrot.lane.b32.xlu0 %v168, 24
        %v271 = vpop.permute.xlu0 %270
        %272 = vrot.lane.b32.xlu0 %v173, 24
        %v273 = vpop.permute.xlu0 %272
        %282 = vrot.lane.b32.xlu0 %v138, 120
        %v283 = vpop.permute.xlu0 %282
        %284 = vrot.lane.b32.xlu0 %v143, 120
        %v285 = vpop.permute.xlu0 %284
        %286 = vrot.lane.b32.xlu0 %v148, 120
        %v287 = vpop.permute.xlu0 %286
        %288 = vrot.lane.b32.xlu0 %v153, 120
        %v289 = vpop.permute.xlu0 %288
        %290 = vrot.lane.b32.xlu0 %v158, 120
        %v291 = vpop.permute.xlu0 %290
        %292 = vrot.lane.b32.xlu0 %v163, 120
        %v293 = vpop.permute.xlu0 %292
        %294 = vrot.lane.b32.xlu0 %v168, 120
        %v295 = vpop.permute.xlu0 %294
        %296 = vrot.lane.b32.xlu0 %v173, 120
        %v297 = vpop.permute.xlu0 %296
        %306 = vrot.lane.b32.xlu0 %v138, 36
        %v307 = vpop.permute.xlu0 %306
        %308 = vrot.lane.b32.xlu0 %v143, 36
        %v309 = vpop.permute.xlu0 %308
        %310 = vrot.lane.b32.xlu0 %v148, 36
        %v311 = vpop.permute.xlu0 %310
        %312 = vrot.lane.b32.xlu0 %v153, 36
        %v313 = vpop.permute.xlu0 %312
        %314 = vrot.lane.b32.xlu0 %v158, 36
        %v315 = vpop.permute.xlu0 %314
        %316 = vrot.lane.b32.xlu0 %v163, 36
        %v317 = vpop.permute.xlu0 %316
        %318 = vrot.lane.b32.xlu0 %v168, 36
        %v319 = vpop.permute.xlu0 %318
        %320 = vrot.lane.b32.xlu0 %v173, 36
        %v321 = vpop.permute.xlu0 %320
        %338 = vrot.lane.b32.xlu0 %v139, 112
        %v339 = vpop.permute.xlu0 %338
        %340 = vrot.lane.b32.xlu0 %v144, 112
        %v341 = vpop.permute.xlu0 %340
        %342 = vrot.lane.b32.xlu0 %v149, 112
        %v343 = vpop.permute.xlu0 %342
        %344 = vrot.lane.b32.xlu0 %v154, 112
        %v345 = vpop.permute.xlu0 %344
        %346 = vrot.lane.b32.xlu0 %v159, 112
        %v347 = vpop.permute.xlu0 %346
        %348 = vrot.lane.b32.xlu0 %v164, 112
        %v349 = vpop.permute.xlu0 %348
        %350 = vrot.lane.b32.xlu0 %v169, 112
        %v351 = vpop.permute.xlu0 %350
        %352 = vrot.lane.b32.xlu0 %v174, 112
        %v353 = vpop.permute.xlu0 %352
        %vm354 = vcmask 916480
        %v355 = vsel %vm354, %v235, %v339
        %v356 = vsel %vm354, %v237, %v341
        %v357 = vsel %vm354, %v239, %v343
        %v358 = vsel %vm354, %v241, %v345
        %v359 = vsel %vm354, %v243, %v347
        %v360 = vsel %vm354, %v245, %v349
        %v361 = vsel %vm354, %v247, %v351
        %v362 = vsel %vm354, %v249, %v353
        %371 = vrot.lane.b32.xlu0 %v139, 120
        %v372 = vpop.permute.xlu0 %371
        %373 = vrot.lane.b32.xlu0 %v144, 120
        %v374 = vpop.permute.xlu0 %373
        %375 = vrot.lane.b32.xlu0 %v149, 120
        %v376 = vpop.permute.xlu0 %375
        %377 = vrot.lane.b32.xlu0 %v154, 120
        %v378 = vpop.permute.xlu0 %377
        %379 = vrot.lane.b32.xlu0 %v159, 120
        %v380 = vpop.permute.xlu0 %379
        %381 = vrot.lane.b32.xlu0 %v164, 120
        %v382 = vpop.permute.xlu0 %381
        %383 = vrot.lane.b32.xlu0 %v169, 120
        %v384 = vpop.permute.xlu0 %383
        %385 = vrot.lane.b32.xlu0 %v174, 120
        %v386 = vpop.permute.xlu0 %385
        %395 = vrot.lane.b32.xlu0 %v139, 104
        %v396 = vpop.permute.xlu0 %395
        %397 = vrot.lane.b32.xlu0 %v144, 104
        %v398 = vpop.permute.xlu0 %397
        %399 = vrot.lane.b32.xlu0 %v149, 104
        %v400 = vpop.permute.xlu0 %399
        %401 = vrot.lane.b32.xlu0 %v154, 104
        %v402 = vpop.permute.xlu0 %401
        %403 = vrot.lane.b32.xlu0 %v159, 104
        %v404 = vpop.permute.xlu0 %403
        %405 = vrot.lane.b32.xlu0 %v164, 104
        %v406 = vpop.permute.xlu0 %405
        %407 = vrot.lane.b32.xlu0 %v169, 104
        %v408 = vpop.permute.xlu0 %407
        %409 = vrot.lane.b32.xlu0 %v174, 104
        %v410 = vpop.permute.xlu0 %409
        %vm419 = vcmask 64512
        %v420 = vsel %vm419, %v138, %v187
        %v421 = vsel %vm419, %v143, %v189
        %v422 = vsel %vm419, %v148, %v191
        %v423 = vsel %vm419, %v153, %v193
        %v424 = vsel %vm419, %v158, %v195
        %v425 = vsel %vm419, %v163, %v197
        %v426 = vsel %vm419, %v168, %v199
        %v427 = vsel %vm419, %v173, %v201
        %vm428 = vcmask 162816
        %v429 = vsel %vm428, %v420, %v211
        %v430 = vsel %vm428, %v421, %v213
        %v431 = vsel %vm428, %v422, %v215
        %v432 = vsel %vm428, %v423, %v217
        %v433 = vsel %vm428, %v424, %v219
        %v434 = vsel %vm428, %v425, %v221
        %v435 = vsel %vm428, %v426, %v223
        %v436 = vsel %vm428, %v427, %v225
        %vm437 = vcmask 228352
        %v438 = vsel %vm437, %v429, %v235
        %v439 = vsel %vm437, %v430, %v237
        %v440 = vsel %vm437, %v431, %v239
        %v441 = vsel %vm437, %v432, %v241
        %v442 = vsel %vm437, %v433, %v243
        %v443 = vsel %vm437, %v434, %v245
        %v444 = vsel %vm437, %v435, %v247
        %v445 = vsel %vm437, %v436, %v249
        %vm446 = vcmask 326656
        %v447 = vsel %vm446, %v438, %v259
        %v448 = vsel %vm446, %v439, %v261
        %v449 = vsel %vm446, %v440, %v263
        %v450 = vsel %vm446, %v441, %v265
        %v451 = vsel %vm446, %v442, %v267
        %v452 = vsel %vm446, %v443, %v269
        %v453 = vsel %vm446, %v444, %v271
        %v454 = vsel %vm446, %v445, %v273
        %vm455 = vcmask 392192
        %v456 = vsel %vm455, %v447, %v283
        %v457 = vsel %vm455, %v448, %v285
        %v458 = vsel %vm455, %v449, %v287
        %v459 = vsel %vm455, %v450, %v289
        %v460 = vsel %vm455, %v451, %v291
        %v461 = vsel %vm455, %v452, %v293
        %v462 = vsel %vm455, %v453, %v295
        %v463 = vsel %vm455, %v454, %v297
        %vm464 = vcmask 490496
        %v465 = vsel %vm464, %v456, %v307
        %v466 = vsel %vm464, %v457, %v309
        %v467 = vsel %vm464, %v458, %v311
        %v468 = vsel %vm464, %v459, %v313
        %v469 = vsel %vm464, %v460, %v315
        %v470 = vsel %vm464, %v461, %v317
        %v471 = vsel %vm464, %v462, %v319
        %v472 = vsel %vm464, %v463, %v321
        %vm473 = vcmask 556032
        %v474 = vsel %vm473, %v465, %v138
        %v475 = vsel %vm473, %v466, %v143
        %v476 = vsel %vm473, %v467, %v148
        %v477 = vsel %vm473, %v468, %v153
        %v478 = vsel %vm473, %v469, %v158
        %v479 = vsel %vm473, %v470, %v163
        %v480 = vsel %vm473, %v471, %v168
        %v481 = vsel %vm473, %v472, %v173
        %vm482 = vcmask 719872
        %v483 = vsel %vm482, %v474, %v187
        %v484 = vsel %vm482, %v475, %v189
        %v485 = vsel %vm482, %v476, %v191
        %v486 = vsel %vm482, %v477, %v193
        %v487 = vsel %vm482, %v478, %v195
        %v488 = vsel %vm482, %v479, %v197
        %v489 = vsel %vm482, %v480, %v199
        %v490 = vsel %vm482, %v481, %v201
        %vm491 = vcmask 818176
        %v492 = vsel %vm491, %v483, %v211
        %v493 = vsel %vm491, %v484, %v213
        %v494 = vsel %vm491, %v485, %v215
        %v495 = vsel %vm491, %v486, %v217
        %v496 = vsel %vm491, %v487, %v219
        %v497 = vsel %vm491, %v488, %v221
        %v498 = vsel %vm491, %v489, %v223
        %v499 = vsel %vm491, %v490, %v225
        %vm500 = vcmask 883712
        %v501 = vsel %vm500, %v492, %v355
        %v502 = vsel %vm500, %v493, %v356
        %v503 = vsel %vm500, %v494, %v357
        %v504 = vsel %vm500, %v495, %v358
        %v505 = vsel %vm500, %v496, %v359
        %v506 = vsel %vm500, %v497, %v360
        %v507 = vsel %vm500, %v498, %v361
        %v508 = vsel %vm500, %v499, %v362
        %vm509 = vcmask 982016
        %v510 = vsel %vm509, %v501, %v259
        %v511 = vsel %vm509, %v502, %v261
        %v512 = vsel %vm509, %v503, %v263
        %v513 = vsel %vm509, %v504, %v265
        %v514 = vsel %vm509, %v505, %v267
        %v515 = vsel %vm509, %v506, %v269
        %v516 = vsel %vm509, %v507, %v271
        %v517 = vsel %vm509, %v508, %v273
        %vm518 = vcmask 97280
        %v519 = vsel %vm518, %v372, %v307
        %v520 = vsel %vm518, %v374, %v309
        %v521 = vsel %vm518, %v376, %v311
        %v522 = vsel %vm518, %v378, %v313
        %v523 = vsel %vm518, %v380, %v315
        %v524 = vsel %vm518, %v382, %v317
        %v525 = vsel %vm518, %v384, %v319
        %v526 = vsel %vm518, %v386, %v321
        %v527 = vsel %vm428, %v519, %v139
        %v528 = vsel %vm428, %v520, %v144
        %v529 = vsel %vm428, %v521, %v149
        %v530 = vsel %vm428, %v522, %v154
        %v531 = vsel %vm428, %v523, %v159
        %v532 = vsel %vm428, %v524, %v164
        %v533 = vsel %vm428, %v525, %v169
        %v534 = vsel %vm428, %v526, %v174
        %v535 = vsel %vm446, %v527, %v396
        %v536 = vsel %vm446, %v528, %v398
        %v537 = vsel %vm446, %v529, %v400
        %v538 = vsel %vm446, %v530, %v402
        %v539 = vsel %vm446, %v531, %v404
        %v540 = vsel %vm446, %v532, %v406
        %v541 = vsel %vm446, %v533, %v408
        %v542 = vsel %vm446, %v534, %v410
        %543 = vrot.lane.b32.xlu0 %v139, 88
        %v544 = vpop.permute.xlu0 %543
        %545 = vrot.lane.b32.xlu0 %v144, 88
        %v546 = vpop.permute.xlu0 %545
        %547 = vrot.lane.b32.xlu0 %v149, 88
        %v548 = vpop.permute.xlu0 %547
        %549 = vrot.lane.b32.xlu0 %v154, 88
        %v550 = vpop.permute.xlu0 %549
        %551 = vrot.lane.b32.xlu0 %v159, 88
        %v552 = vpop.permute.xlu0 %551
        %553 = vrot.lane.b32.xlu0 %v164, 88
        %v554 = vpop.permute.xlu0 %553
        %555 = vrot.lane.b32.xlu0 %v169, 88
        %v556 = vpop.permute.xlu0 %555
        %557 = vrot.lane.b32.xlu0 %v174, 88
        %v558 = vpop.permute.xlu0 %557
        %567 = vrot.lane.b32.xlu0 %v139, 60
        %v568 = vpop.permute.xlu0 %567
        %569 = vrot.lane.b32.xlu0 %v144, 60
        %v570 = vpop.permute.xlu0 %569
        %571 = vrot.lane.b32.xlu0 %v149, 60
        %v572 = vpop.permute.xlu0 %571
        %573 = vrot.lane.b32.xlu0 %v154, 60
        %v574 = vpop.permute.xlu0 %573
        %575 = vrot.lane.b32.xlu0 %v159, 60
        %v576 = vpop.permute.xlu0 %575
        %577 = vrot.lane.b32.xlu0 %v164, 60
        %v578 = vpop.permute.xlu0 %577
        %579 = vrot.lane.b32.xlu0 %v169, 60
        %v580 = vpop.permute.xlu0 %579
        %581 = vrot.lane.b32.xlu0 %v174, 60
        %v582 = vpop.permute.xlu0 %581
        %591 = vrot.lane.b32.xlu0 %v139, 100
        %v592 = vpop.permute.xlu0 %591
        %593 = vrot.lane.b32.xlu0 %v144, 100
        %v594 = vpop.permute.xlu0 %593
        %595 = vrot.lane.b32.xlu0 %v149, 100
        %v596 = vpop.permute.xlu0 %595
        %597 = vrot.lane.b32.xlu0 %v154, 100
        %v598 = vpop.permute.xlu0 %597
        %599 = vrot.lane.b32.xlu0 %v159, 100
        %v600 = vpop.permute.xlu0 %599
        %601 = vrot.lane.b32.xlu0 %v164, 100
        %v602 = vpop.permute.xlu0 %601
        %603 = vrot.lane.b32.xlu0 %v169, 100
        %v604 = vpop.permute.xlu0 %603
        %605 = vrot.lane.b32.xlu0 %v174, 100
        %v606 = vpop.permute.xlu0 %605
        %615 = vrot.lane.b32.xlu0 %v139, 68
        %v616 = vpop.permute.xlu0 %615
        %617 = vrot.lane.b32.xlu0 %v144, 68
        %v618 = vpop.permute.xlu0 %617
        %619 = vrot.lane.b32.xlu0 %v149, 68
        %v620 = vpop.permute.xlu0 %619
        %621 = vrot.lane.b32.xlu0 %v154, 68
        %v622 = vpop.permute.xlu0 %621
        %623 = vrot.lane.b32.xlu0 %v159, 68
        %v624 = vpop.permute.xlu0 %623
        %625 = vrot.lane.b32.xlu0 %v164, 68
        %v626 = vpop.permute.xlu0 %625
        %627 = vrot.lane.b32.xlu0 %v169, 68
        %v628 = vpop.permute.xlu0 %627
        %629 = vrot.lane.b32.xlu0 %v174, 68
        %v630 = vpop.permute.xlu0 %629
        %647 = vrot.lane.b32.xlu0 %v139, 76
        %v648 = vpop.permute.xlu0 %647
        %649 = vrot.lane.b32.xlu0 %v144, 76
        %v650 = vpop.permute.xlu0 %649
        %651 = vrot.lane.b32.xlu0 %v149, 76
        %v652 = vpop.permute.xlu0 %651
        %653 = vrot.lane.b32.xlu0 %v154, 76
        %v654 = vpop.permute.xlu0 %653
        %655 = vrot.lane.b32.xlu0 %v159, 76
        %v656 = vpop.permute.xlu0 %655
        %657 = vrot.lane.b32.xlu0 %v164, 76
        %v658 = vpop.permute.xlu0 %657
        %659 = vrot.lane.b32.xlu0 %v169, 76
        %v660 = vpop.permute.xlu0 %659
        %661 = vrot.lane.b32.xlu0 %v174, 76
        %v662 = vpop.permute.xlu0 %661
        %679 = vrot.lane.b32.xlu0 %v140, 52
        %v680 = vpop.permute.xlu0 %679
        %681 = vrot.lane.b32.xlu0 %v145, 52
        %v682 = vpop.permute.xlu0 %681
        %683 = vrot.lane.b32.xlu0 %v150, 52
        %v684 = vpop.permute.xlu0 %683
        %685 = vrot.lane.b32.xlu0 %v155, 52
        %v686 = vpop.permute.xlu0 %685
        %687 = vrot.lane.b32.xlu0 %v160, 52
        %v688 = vpop.permute.xlu0 %687
        %689 = vrot.lane.b32.xlu0 %v165, 52
        %v690 = vpop.permute.xlu0 %689
        %691 = vrot.lane.b32.xlu0 %v170, 52
        %v692 = vpop.permute.xlu0 %691
        %693 = vrot.lane.b32.xlu0 %v175, 52
        %v694 = vpop.permute.xlu0 %693
        %703 = vrot.lane.b32.xlu0 %v140, 60
        %v704 = vpop.permute.xlu0 %703
        %705 = vrot.lane.b32.xlu0 %v145, 60
        %v706 = vpop.permute.xlu0 %705
        %707 = vrot.lane.b32.xlu0 %v150, 60
        %v708 = vpop.permute.xlu0 %707
        %709 = vrot.lane.b32.xlu0 %v155, 60
        %v710 = vpop.permute.xlu0 %709
        %711 = vrot.lane.b32.xlu0 %v160, 60
        %v712 = vpop.permute.xlu0 %711
        %713 = vrot.lane.b32.xlu0 %v165, 60
        %v714 = vpop.permute.xlu0 %713
        %715 = vrot.lane.b32.xlu0 %v170, 60
        %v716 = vpop.permute.xlu0 %715
        %717 = vrot.lane.b32.xlu0 %v175, 60
        %v718 = vpop.permute.xlu0 %717
        %727 = vrot.lane.b32.xlu0 %v140, 100
        %v728 = vpop.permute.xlu0 %727
        %729 = vrot.lane.b32.xlu0 %v145, 100
        %v730 = vpop.permute.xlu0 %729
        %731 = vrot.lane.b32.xlu0 %v150, 100
        %v732 = vpop.permute.xlu0 %731
        %733 = vrot.lane.b32.xlu0 %v155, 100
        %v734 = vpop.permute.xlu0 %733
        %735 = vrot.lane.b32.xlu0 %v160, 100
        %v736 = vpop.permute.xlu0 %735
        %737 = vrot.lane.b32.xlu0 %v165, 100
        %v738 = vpop.permute.xlu0 %737
        %739 = vrot.lane.b32.xlu0 %v170, 100
        %v740 = vpop.permute.xlu0 %739
        %741 = vrot.lane.b32.xlu0 %v175, 100
        %v742 = vpop.permute.xlu0 %741
        %751 = vrot.lane.b32.xlu0 %v140, 68
        %v752 = vpop.permute.xlu0 %751
        %753 = vrot.lane.b32.xlu0 %v145, 68
        %v754 = vpop.permute.xlu0 %753
        %755 = vrot.lane.b32.xlu0 %v150, 68
        %v756 = vpop.permute.xlu0 %755
        %757 = vrot.lane.b32.xlu0 %v155, 68
        %v758 = vpop.permute.xlu0 %757
        %759 = vrot.lane.b32.xlu0 %v160, 68
        %v760 = vpop.permute.xlu0 %759
        %761 = vrot.lane.b32.xlu0 %v165, 68
        %v762 = vpop.permute.xlu0 %761
        %763 = vrot.lane.b32.xlu0 %v170, 68
        %v764 = vpop.permute.xlu0 %763
        %765 = vrot.lane.b32.xlu0 %v175, 68
        %v766 = vpop.permute.xlu0 %765
        %775 = vrot.lane.b32.xlu0 %v140, 112
        %v776 = vpop.permute.xlu0 %775
        %777 = vrot.lane.b32.xlu0 %v145, 112
        %v778 = vpop.permute.xlu0 %777
        %779 = vrot.lane.b32.xlu0 %v150, 112
        %v780 = vpop.permute.xlu0 %779
        %781 = vrot.lane.b32.xlu0 %v155, 112
        %v782 = vpop.permute.xlu0 %781
        %783 = vrot.lane.b32.xlu0 %v160, 112
        %v784 = vpop.permute.xlu0 %783
        %785 = vrot.lane.b32.xlu0 %v165, 112
        %v786 = vpop.permute.xlu0 %785
        %787 = vrot.lane.b32.xlu0 %v170, 112
        %v788 = vpop.permute.xlu0 %787
        %789 = vrot.lane.b32.xlu0 %v175, 112
        %v790 = vpop.permute.xlu0 %789
        %799 = vrot.lane.b32.xlu0 %v140, 76
        %v800 = vpop.permute.xlu0 %799
        %801 = vrot.lane.b32.xlu0 %v145, 76
        %v802 = vpop.permute.xlu0 %801
        %803 = vrot.lane.b32.xlu0 %v150, 76
        %v804 = vpop.permute.xlu0 %803
        %805 = vrot.lane.b32.xlu0 %v155, 76
        %v806 = vpop.permute.xlu0 %805
        %807 = vrot.lane.b32.xlu0 %v160, 76
        %v808 = vpop.permute.xlu0 %807
        %809 = vrot.lane.b32.xlu0 %v165, 76
        %v810 = vpop.permute.xlu0 %809
        %811 = vrot.lane.b32.xlu0 %v170, 76
        %v812 = vpop.permute.xlu0 %811
        %813 = vrot.lane.b32.xlu0 %v175, 76
        %v814 = vpop.permute.xlu0 %813
        %823 = vrot.lane.b32.xlu0 %v140, 88
        %v824 = vpop.permute.xlu0 %823
        %825 = vrot.lane.b32.xlu0 %v145, 88
        %v826 = vpop.permute.xlu0 %825
        %827 = vrot.lane.b32.xlu0 %v150, 88
        %v828 = vpop.permute.xlu0 %827
        %829 = vrot.lane.b32.xlu0 %v155, 88
        %v830 = vpop.permute.xlu0 %829
        %831 = vrot.lane.b32.xlu0 %v160, 88
        %v832 = vpop.permute.xlu0 %831
        %833 = vrot.lane.b32.xlu0 %v165, 88
        %v834 = vpop.permute.xlu0 %833
        %835 = vrot.lane.b32.xlu0 %v170, 88
        %v836 = vpop.permute.xlu0 %835
        %837 = vrot.lane.b32.xlu0 %v175, 88
        %v838 = vpop.permute.xlu0 %837
        %v847 = vsel %vm419, %v544, %v568
        %v848 = vsel %vm419, %v546, %v570
        %v849 = vsel %vm419, %v548, %v572
        %v850 = vsel %vm419, %v550, %v574
        %v851 = vsel %vm419, %v552, %v576
        %v852 = vsel %vm419, %v554, %v578
        %v853 = vsel %vm419, %v556, %v580
        %v854 = vsel %vm419, %v558, %v582
        %v855 = vsel %vm428, %v847, %v592
        %v856 = vsel %vm428, %v848, %v594
        %v857 = vsel %vm428, %v849, %v596
        %v858 = vsel %vm428, %v850, %v598
        %v859 = vsel %vm428, %v851, %v600
        %v860 = vsel %vm428, %v852, %v602
        %v861 = vsel %vm428, %v853, %v604
        %v862 = vsel %vm428, %v854, %v606
        %v863 = vsel %vm437, %v855, %v616
        %v864 = vsel %vm437, %v856, %v618
        %v865 = vsel %vm437, %v857, %v620
        %v866 = vsel %vm437, %v858, %v622
        %v867 = vsel %vm437, %v859, %v624
        %v868 = vsel %vm437, %v860, %v626
        %v869 = vsel %vm437, %v861, %v628
        %v870 = vsel %vm437, %v862, %v630
        %v871 = vsel %vm446, %v863, %v339
        %v872 = vsel %vm446, %v864, %v341
        %v873 = vsel %vm446, %v865, %v343
        %v874 = vsel %vm446, %v866, %v345
        %v875 = vsel %vm446, %v867, %v347
        %v876 = vsel %vm446, %v868, %v349
        %v877 = vsel %vm446, %v869, %v351
        %v878 = vsel %vm446, %v870, %v353
        %v879 = vsel %vm455, %v871, %v648
        %v880 = vsel %vm455, %v872, %v650
        %v881 = vsel %vm455, %v873, %v652
        %v882 = vsel %vm455, %v874, %v654
        %v883 = vsel %vm455, %v875, %v656
        %v884 = vsel %vm455, %v876, %v658
        %v885 = vsel %vm455, %v877, %v660
        %v886 = vsel %vm455, %v878, %v662
        %v887 = vsel %vm473, %v879, %v680
        %v888 = vsel %vm473, %v880, %v682
        %v889 = vsel %vm473, %v881, %v684
        %v890 = vsel %vm473, %v882, %v686
        %v891 = vsel %vm473, %v883, %v688
        %v892 = vsel %vm473, %v884, %v690
        %v893 = vsel %vm473, %v885, %v692
        %v894 = vsel %vm473, %v886, %v694
        %vm895 = vcmask 654336
        %v896 = vsel %vm895, %v887, %v544
        %v897 = vsel %vm895, %v888, %v546
        %v898 = vsel %vm895, %v889, %v548
        %v899 = vsel %vm895, %v890, %v550
        %v900 = vsel %vm895, %v891, %v552
        %v901 = vsel %vm895, %v892, %v554
        %v902 = vsel %vm895, %v893, %v556
        %v903 = vsel %vm895, %v894, %v558
        %v904 = vsel %vm482, %v896, %v704
        %v905 = vsel %vm482, %v897, %v706
        %v906 = vsel %vm482, %v898, %v708
        %v907 = vsel %vm482, %v899, %v710
        %v908 = vsel %vm482, %v900, %v712
        %v909 = vsel %vm482, %v901, %v714
        %v910 = vsel %vm482, %v902, %v716
        %v911 = vsel %vm482, %v903, %v718
        %v912 = vsel %vm491, %v904, %v728
        %v913 = vsel %vm491, %v905, %v730
        %v914 = vsel %vm491, %v906, %v732
        %v915 = vsel %vm491, %v907, %v734
        %v916 = vsel %vm491, %v908, %v736
        %v917 = vsel %vm491, %v909, %v738
        %v918 = vsel %vm491, %v910, %v740
        %v919 = vsel %vm491, %v911, %v742
        %v920 = vsel %vm500, %v912, %v752
        %v921 = vsel %vm500, %v913, %v754
        %v922 = vsel %vm500, %v914, %v756
        %v923 = vsel %vm500, %v915, %v758
        %v924 = vsel %vm500, %v916, %v760
        %v925 = vsel %vm500, %v917, %v762
        %v926 = vsel %vm500, %v918, %v764
        %v927 = vsel %vm500, %v919, %v766
        %v928 = vsel %vm509, %v920, %v776
        %v929 = vsel %vm509, %v921, %v778
        %v930 = vsel %vm509, %v922, %v780
        %v931 = vsel %vm509, %v923, %v782
        %v932 = vsel %vm509, %v924, %v784
        %v933 = vsel %vm509, %v925, %v786
        %v934 = vsel %vm509, %v926, %v788
        %v935 = vsel %vm509, %v927, %v790
        %v936 = vsel %vm428, %v800, %v680
        %v937 = vsel %vm428, %v802, %v682
        %v938 = vsel %vm428, %v804, %v684
        %v939 = vsel %vm428, %v806, %v686
        %v940 = vsel %vm428, %v808, %v688
        %v941 = vsel %vm428, %v810, %v690
        %v942 = vsel %vm428, %v812, %v692
        %v943 = vsel %vm428, %v814, %v694
        %vm944 = vcmask 261120
        %v945 = vsel %vm944, %v936, %v824
        %v946 = vsel %vm944, %v937, %v826
        %v947 = vsel %vm944, %v938, %v828
        %v948 = vsel %vm944, %v939, %v830
        %v949 = vsel %vm944, %v940, %v832
        %v950 = vsel %vm944, %v941, %v834
        %v951 = vsel %vm944, %v942, %v836
        %v952 = vsel %vm944, %v943, %v838
        %v953 = vsel %vm446, %v945, %v704
        %v954 = vsel %vm446, %v946, %v706
        %v955 = vsel %vm446, %v947, %v708
        %v956 = vsel %vm446, %v948, %v710
        %v957 = vsel %vm446, %v949, %v712
        %v958 = vsel %vm446, %v950, %v714
        %v959 = vsel %vm446, %v951, %v716
        %v960 = vsel %vm446, %v952, %v718
        %961 = vrot.lane.b32.xlu0 %v140, 48
        %v962 = vpop.permute.xlu0 %961
        %963 = vrot.lane.b32.xlu0 %v145, 48
        %v964 = vpop.permute.xlu0 %963
        %965 = vrot.lane.b32.xlu0 %v150, 48
        %v966 = vpop.permute.xlu0 %965
        %967 = vrot.lane.b32.xlu0 %v155, 48
        %v968 = vpop.permute.xlu0 %967
        %969 = vrot.lane.b32.xlu0 %v160, 48
        %v970 = vpop.permute.xlu0 %969
        %971 = vrot.lane.b32.xlu0 %v165, 48
        %v972 = vpop.permute.xlu0 %971
        %973 = vrot.lane.b32.xlu0 %v170, 48
        %v974 = vpop.permute.xlu0 %973
        %975 = vrot.lane.b32.xlu0 %v175, 48
        %v976 = vpop.permute.xlu0 %975
        %993 = vrot.lane.b32.xlu0 %v140, 16
        %v994 = vpop.permute.xlu0 %993
        %995 = vrot.lane.b32.xlu0 %v141, 16
        %v996 = vpop.permute.xlu0 %995
        %997 = vrot.lane.b32.xlu0 %v145, 16
        %v998 = vpop.permute.xlu0 %997
        %999 = vrot.lane.b32.xlu0 %v146, 16
        %v1000 = vpop.permute.xlu0 %999
        %1001 = vrot.lane.b32.xlu0 %v150, 16
        %v1002 = vpop.permute.xlu0 %1001
        %1003 = vrot.lane.b32.xlu0 %v151, 16
        %v1004 = vpop.permute.xlu0 %1003
        %1005 = vrot.lane.b32.xlu0 %v155, 16
        %v1006 = vpop.permute.xlu0 %1005
        %1007 = vrot.lane.b32.xlu0 %v156, 16
        %v1008 = vpop.permute.xlu0 %1007
        %1009 = vrot.lane.b32.xlu0 %v160, 16
        %v1010 = vpop.permute.xlu0 %1009
        %1011 = vrot.lane.b32.xlu0 %v161, 16
        %v1012 = vpop.permute.xlu0 %1011
        %1013 = vrot.lane.b32.xlu0 %v165, 16
        %v1014 = vpop.permute.xlu0 %1013
        %1015 = vrot.lane.b32.xlu0 %v166, 16
        %v1016 = vpop.permute.xlu0 %1015
        %1017 = vrot.lane.b32.xlu0 %v170, 16
        %v1018 = vpop.permute.xlu0 %1017
        %1019 = vrot.lane.b32.xlu0 %v171, 16
        %v1020 = vpop.permute.xlu0 %1019
        %1021 = vrot.lane.b32.xlu0 %v175, 16
        %v1022 = vpop.permute.xlu0 %1021
        %1023 = vrot.lane.b32.xlu0 %v176, 16
        %v1024 = vpop.permute.xlu0 %1023
        %vm1025 = vcmask 130048
        %v1026 = vsel %vm1025, %v994, %v996
        %v1027 = vsel %vm1025, %v998, %v1000
        %v1028 = vsel %vm1025, %v1002, %v1004
        %v1029 = vsel %vm1025, %v1006, %v1008
        %v1030 = vsel %vm1025, %v1010, %v1012
        %v1031 = vsel %vm1025, %v1014, %v1016
        %v1032 = vsel %vm1025, %v1018, %v1020
        %v1033 = vsel %vm1025, %v1022, %v1024
        %1042 = vrot.lane.b32.xlu0 %v141, 24
        %v1043 = vpop.permute.xlu0 %1042
        %1044 = vrot.lane.b32.xlu0 %v146, 24
        %v1045 = vpop.permute.xlu0 %1044
        %1046 = vrot.lane.b32.xlu0 %v151, 24
        %v1047 = vpop.permute.xlu0 %1046
        %1048 = vrot.lane.b32.xlu0 %v156, 24
        %v1049 = vpop.permute.xlu0 %1048
        %1050 = vrot.lane.b32.xlu0 %v161, 24
        %v1051 = vpop.permute.xlu0 %1050
        %1052 = vrot.lane.b32.xlu0 %v166, 24
        %v1053 = vpop.permute.xlu0 %1052
        %1054 = vrot.lane.b32.xlu0 %v171, 24
        %v1055 = vpop.permute.xlu0 %1054
        %1056 = vrot.lane.b32.xlu0 %v176, 24
        %v1057 = vpop.permute.xlu0 %1056
        %1066 = vrot.lane.b32.xlu0 %v141, 36
        %v1067 = vpop.permute.xlu0 %1066
        %1068 = vrot.lane.b32.xlu0 %v146, 36
        %v1069 = vpop.permute.xlu0 %1068
        %1070 = vrot.lane.b32.xlu0 %v151, 36
        %v1071 = vpop.permute.xlu0 %1070
        %1072 = vrot.lane.b32.xlu0 %v156, 36
        %v1073 = vpop.permute.xlu0 %1072
        %1074 = vrot.lane.b32.xlu0 %v161, 36
        %v1075 = vpop.permute.xlu0 %1074
        %1076 = vrot.lane.b32.xlu0 %v166, 36
        %v1077 = vpop.permute.xlu0 %1076
        %1078 = vrot.lane.b32.xlu0 %v171, 36
        %v1079 = vpop.permute.xlu0 %1078
        %1080 = vrot.lane.b32.xlu0 %v176, 36
        %v1081 = vpop.permute.xlu0 %1080
        %1090 = vrot.lane.b32.xlu0 %v141, 8
        %v1091 = vpop.permute.xlu0 %1090
        %1092 = vrot.lane.b32.xlu0 %v146, 8
        %v1093 = vpop.permute.xlu0 %1092
        %1094 = vrot.lane.b32.xlu0 %v151, 8
        %v1095 = vpop.permute.xlu0 %1094
        %1096 = vrot.lane.b32.xlu0 %v156, 8
        %v1097 = vpop.permute.xlu0 %1096
        %1098 = vrot.lane.b32.xlu0 %v161, 8
        %v1099 = vpop.permute.xlu0 %1098
        %1100 = vrot.lane.b32.xlu0 %v166, 8
        %v1101 = vpop.permute.xlu0 %1100
        %1102 = vrot.lane.b32.xlu0 %v171, 8
        %v1103 = vpop.permute.xlu0 %1102
        %1104 = vrot.lane.b32.xlu0 %v176, 8
        %v1105 = vpop.permute.xlu0 %1104
        %1114 = vrot.lane.b32.xlu0 %v141, 48
        %v1115 = vpop.permute.xlu0 %1114
        %1116 = vrot.lane.b32.xlu0 %v146, 48
        %v1117 = vpop.permute.xlu0 %1116
        %1118 = vrot.lane.b32.xlu0 %v151, 48
        %v1119 = vpop.permute.xlu0 %1118
        %1120 = vrot.lane.b32.xlu0 %v156, 48
        %v1121 = vpop.permute.xlu0 %1120
        %1122 = vrot.lane.b32.xlu0 %v161, 48
        %v1123 = vpop.permute.xlu0 %1122
        %1124 = vrot.lane.b32.xlu0 %v166, 48
        %v1125 = vpop.permute.xlu0 %1124
        %1126 = vrot.lane.b32.xlu0 %v171, 48
        %v1127 = vpop.permute.xlu0 %1126
        %1128 = vrot.lane.b32.xlu0 %v176, 48
        %v1129 = vpop.permute.xlu0 %1128
        %1146 = vrot.lane.b32.xlu0 %v141, 60
        %v1147 = vpop.permute.xlu0 %1146
        %1148 = vrot.lane.b32.xlu0 %v146, 60
        %v1149 = vpop.permute.xlu0 %1148
        %1150 = vrot.lane.b32.xlu0 %v151, 60
        %v1151 = vpop.permute.xlu0 %1150
        %1152 = vrot.lane.b32.xlu0 %v156, 60
        %v1153 = vpop.permute.xlu0 %1152
        %1154 = vrot.lane.b32.xlu0 %v161, 60
        %v1155 = vpop.permute.xlu0 %1154
        %1156 = vrot.lane.b32.xlu0 %v166, 60
        %v1157 = vpop.permute.xlu0 %1156
        %1158 = vrot.lane.b32.xlu0 %v171, 60
        %v1159 = vpop.permute.xlu0 %1158
        %1160 = vrot.lane.b32.xlu0 %v176, 60
        %v1161 = vpop.permute.xlu0 %1160
        %1178 = vrot.lane.b32.xlu0 %v142, 8
        %v1179 = vpop.permute.xlu0 %1178
        %1180 = vrot.lane.b32.xlu0 %v147, 8
        %v1181 = vpop.permute.xlu0 %1180
        %1182 = vrot.lane.b32.xlu0 %v152, 8
        %v1183 = vpop.permute.xlu0 %1182
        %1184 = vrot.lane.b32.xlu0 %v157, 8
        %v1185 = vpop.permute.xlu0 %1184
        %1186 = vrot.lane.b32.xlu0 %v162, 8
        %v1187 = vpop.permute.xlu0 %1186
        %1188 = vrot.lane.b32.xlu0 %v167, 8
        %v1189 = vpop.permute.xlu0 %1188
        %1190 = vrot.lane.b32.xlu0 %v172, 8
        %v1191 = vpop.permute.xlu0 %1190
        %1192 = vrot.lane.b32.xlu0 %v177, 8
        %v1193 = vpop.permute.xlu0 %1192
        %1202 = vrot.lane.b32.xlu0 %v142, 16
        %v1203 = vpop.permute.xlu0 %1202
        %1204 = vrot.lane.b32.xlu0 %v147, 16
        %v1205 = vpop.permute.xlu0 %1204
        %1206 = vrot.lane.b32.xlu0 %v152, 16
        %v1207 = vpop.permute.xlu0 %1206
        %1208 = vrot.lane.b32.xlu0 %v157, 16
        %v1209 = vpop.permute.xlu0 %1208
        %1210 = vrot.lane.b32.xlu0 %v162, 16
        %v1211 = vpop.permute.xlu0 %1210
        %1212 = vrot.lane.b32.xlu0 %v167, 16
        %v1213 = vpop.permute.xlu0 %1212
        %1214 = vrot.lane.b32.xlu0 %v172, 16
        %v1215 = vpop.permute.xlu0 %1214
        %1216 = vrot.lane.b32.xlu0 %v177, 16
        %v1217 = vpop.permute.xlu0 %1216
        %v1226 = vsel %vm419, %v962, %v1026
        %v1227 = vsel %vm419, %v964, %v1027
        %v1228 = vsel %vm419, %v966, %v1028
        %v1229 = vsel %vm419, %v968, %v1029
        %v1230 = vsel %vm419, %v970, %v1030
        %v1231 = vsel %vm419, %v972, %v1031
        %v1232 = vsel %vm419, %v974, %v1032
        %v1233 = vsel %vm419, %v976, %v1033
        %v1234 = vsel %vm428, %v1226, %v704
        %v1235 = vsel %vm428, %v1227, %v706
        %v1236 = vsel %vm428, %v1228, %v708
        %v1237 = vsel %vm428, %v1229, %v710
        %v1238 = vsel %vm428, %v1230, %v712
        %v1239 = vsel %vm428, %v1231, %v714
        %v1240 = vsel %vm428, %v1232, %v716
        %v1241 = vsel %vm428, %v1233, %v718
        %v1242 = vsel %vm437, %v1234, %v1043
        %v1243 = vsel %vm437, %v1235, %v1045
        %v1244 = vsel %vm437, %v1236, %v1047
        %v1245 = vsel %vm437, %v1237, %v1049
        %v1246 = vsel %vm437, %v1238, %v1051
        %v1247 = vsel %vm437, %v1239, %v1053
        %v1248 = vsel %vm437, %v1240, %v1055
        %v1249 = vsel %vm437, %v1241, %v1057
        %v1250 = vsel %vm455, %v1242, %v141
        %v1251 = vsel %vm455, %v1243, %v146
        %v1252 = vsel %vm455, %v1244, %v151
        %v1253 = vsel %vm455, %v1245, %v156
        %v1254 = vsel %vm455, %v1246, %v161
        %v1255 = vsel %vm455, %v1247, %v166
        %v1256 = vsel %vm455, %v1248, %v171
        %v1257 = vsel %vm455, %v1249, %v176
        %v1258 = vsel %vm464, %v1250, %v1067
        %v1259 = vsel %vm464, %v1251, %v1069
        %v1260 = vsel %vm464, %v1252, %v1071
        %v1261 = vsel %vm464, %v1253, %v1073
        %v1262 = vsel %vm464, %v1254, %v1075
        %v1263 = vsel %vm464, %v1255, %v1077
        %v1264 = vsel %vm464, %v1256, %v1079
        %v1265 = vsel %vm464, %v1257, %v1081
        %v1266 = vsel %vm473, %v1258, %v1091
        %v1267 = vsel %vm473, %v1259, %v1093
        %v1268 = vsel %vm473, %v1260, %v1095
        %v1269 = vsel %vm473, %v1261, %v1097
        %v1270 = vsel %vm473, %v1262, %v1099
        %v1271 = vsel %vm473, %v1263, %v1101
        %v1272 = vsel %vm473, %v1264, %v1103
        %v1273 = vsel %vm473, %v1265, %v1105
        %v1274 = vsel %vm895, %v1266, %v1115
        %v1275 = vsel %vm895, %v1267, %v1117
        %v1276 = vsel %vm895, %v1268, %v1119
        %v1277 = vsel %vm895, %v1269, %v1121
        %v1278 = vsel %vm895, %v1270, %v1123
        %v1279 = vsel %vm895, %v1271, %v1125
        %v1280 = vsel %vm895, %v1272, %v1127
        %v1281 = vsel %vm895, %v1273, %v1129
        %v1282 = vsel %vm482, %v1274, %v996
        %v1283 = vsel %vm482, %v1275, %v1000
        %v1284 = vsel %vm482, %v1276, %v1004
        %v1285 = vsel %vm482, %v1277, %v1008
        %v1286 = vsel %vm482, %v1278, %v1012
        %v1287 = vsel %vm482, %v1279, %v1016
        %v1288 = vsel %vm482, %v1280, %v1020
        %v1289 = vsel %vm482, %v1281, %v1024
        %v1290 = vsel %vm491, %v1282, %v1147
        %v1291 = vsel %vm491, %v1283, %v1149
        %v1292 = vsel %vm491, %v1284, %v1151
        %v1293 = vsel %vm491, %v1285, %v1153
        %v1294 = vsel %vm491, %v1286, %v1155
        %v1295 = vsel %vm491, %v1287, %v1157
        %v1296 = vsel %vm491, %v1288, %v1159
        %v1297 = vsel %vm491, %v1289, %v1161
        %v1298 = vsel %vm500, %v1290, %v1043
        %v1299 = vsel %vm500, %v1291, %v1045
        %v1300 = vsel %vm500, %v1292, %v1047
        %v1301 = vsel %vm500, %v1293, %v1049
        %v1302 = vsel %vm500, %v1294, %v1051
        %v1303 = vsel %vm500, %v1295, %v1053
        %v1304 = vsel %vm500, %v1296, %v1055
        %v1305 = vsel %vm500, %v1297, %v1057
        %v1306 = vsel %vm518, %v142, %v1067
        %v1307 = vsel %vm518, %v147, %v1069
        %v1308 = vsel %vm518, %v152, %v1071
        %v1309 = vsel %vm518, %v157, %v1073
        %v1310 = vsel %vm518, %v162, %v1075
        %v1311 = vsel %vm518, %v167, %v1077
        %v1312 = vsel %vm518, %v172, %v1079
        %v1313 = vsel %vm518, %v177, %v1081
        %v1314 = vsel %vm428, %v1306, %v1179
        %v1315 = vsel %vm428, %v1307, %v1181
        %v1316 = vsel %vm428, %v1308, %v1183
        %v1317 = vsel %vm428, %v1309, %v1185
        %v1318 = vsel %vm428, %v1310, %v1187
        %v1319 = vsel %vm428, %v1311, %v1189
        %v1320 = vsel %vm428, %v1312, %v1191
        %v1321 = vsel %vm428, %v1313, %v1193
        %v1322 = vsel %vm944, %v1314, %v1115
        %v1323 = vsel %vm944, %v1315, %v1117
        %v1324 = vsel %vm944, %v1316, %v1119
        %v1325 = vsel %vm944, %v1317, %v1121
        %v1326 = vsel %vm944, %v1318, %v1123
        %v1327 = vsel %vm944, %v1319, %v1125
        %v1328 = vsel %vm944, %v1320, %v1127
        %v1329 = vsel %vm944, %v1321, %v1129
        %v1330 = vsel %vm446, %v1322, %v1203
        %v1331 = vsel %vm446, %v1323, %v1205
        %v1332 = vsel %vm446, %v1324, %v1207
        %v1333 = vsel %vm446, %v1325, %v1209
        %v1334 = vsel %vm446, %v1326, %v1211
        %v1335 = vsel %vm446, %v1327, %v1213
        %v1336 = vsel %vm446, %v1328, %v1215
        %v1337 = vsel %vm446, %v1329, %v1217
        %1338 = vrot.lane.b32.xlu0 %v142, 100
        %v1339 = vpop.permute.xlu0 %1338
        %1340 = vrot.lane.b32.xlu0 %v147, 100
        %v1341 = vpop.permute.xlu0 %1340
        %1342 = vrot.lane.b32.xlu0 %v152, 100
        %v1343 = vpop.permute.xlu0 %1342
        %1344 = vrot.lane.b32.xlu0 %v157, 100
        %v1345 = vpop.permute.xlu0 %1344
        %1346 = vrot.lane.b32.xlu0 %v162, 100
        %v1347 = vpop.permute.xlu0 %1346
        %1348 = vrot.lane.b32.xlu0 %v167, 100
        %v1349 = vpop.permute.xlu0 %1348
        %1350 = vrot.lane.b32.xlu0 %v172, 100
        %v1351 = vpop.permute.xlu0 %1350
        %1352 = vrot.lane.b32.xlu0 %v177, 100
        %v1353 = vpop.permute.xlu0 %1352
        %1362 = vrot.lane.b32.xlu0 %v142, 76
        %v1363 = vpop.permute.xlu0 %1362
        %1364 = vrot.lane.b32.xlu0 %v147, 76
        %v1365 = vpop.permute.xlu0 %1364
        %1366 = vrot.lane.b32.xlu0 %v152, 76
        %v1367 = vpop.permute.xlu0 %1366
        %1368 = vrot.lane.b32.xlu0 %v157, 76
        %v1369 = vpop.permute.xlu0 %1368
        %1370 = vrot.lane.b32.xlu0 %v162, 76
        %v1371 = vpop.permute.xlu0 %1370
        %1372 = vrot.lane.b32.xlu0 %v167, 76
        %v1373 = vpop.permute.xlu0 %1372
        %1374 = vrot.lane.b32.xlu0 %v172, 76
        %v1375 = vpop.permute.xlu0 %1374
        %1376 = vrot.lane.b32.xlu0 %v177, 76
        %v1377 = vpop.permute.xlu0 %1376
        %1386 = vrot.lane.b32.xlu0 %v142, 112
        %v1387 = vpop.permute.xlu0 %1386
        %1388 = vrot.lane.b32.xlu0 %v147, 112
        %v1389 = vpop.permute.xlu0 %1388
        %1390 = vrot.lane.b32.xlu0 %v152, 112
        %v1391 = vpop.permute.xlu0 %1390
        %1392 = vrot.lane.b32.xlu0 %v157, 112
        %v1393 = vpop.permute.xlu0 %1392
        %1394 = vrot.lane.b32.xlu0 %v162, 112
        %v1395 = vpop.permute.xlu0 %1394
        %1396 = vrot.lane.b32.xlu0 %v167, 112
        %v1397 = vpop.permute.xlu0 %1396
        %1398 = vrot.lane.b32.xlu0 %v172, 112
        %v1399 = vpop.permute.xlu0 %1398
        %1400 = vrot.lane.b32.xlu0 %v177, 112
        %v1401 = vpop.permute.xlu0 %1400
        %1410 = vrot.lane.b32.xlu0 %v142, 84
        %v1411 = vpop.permute.xlu0 %1410
        %1412 = vrot.lane.b32.xlu0 %v147, 84
        %v1413 = vpop.permute.xlu0 %1412
        %1414 = vrot.lane.b32.xlu0 %v152, 84
        %v1415 = vpop.permute.xlu0 %1414
        %1416 = vrot.lane.b32.xlu0 %v157, 84
        %v1417 = vpop.permute.xlu0 %1416
        %1418 = vrot.lane.b32.xlu0 %v162, 84
        %v1419 = vpop.permute.xlu0 %1418
        %1420 = vrot.lane.b32.xlu0 %v167, 84
        %v1421 = vpop.permute.xlu0 %1420
        %1422 = vrot.lane.b32.xlu0 %v172, 84
        %v1423 = vpop.permute.xlu0 %1422
        %1424 = vrot.lane.b32.xlu0 %v177, 84
        %v1425 = vpop.permute.xlu0 %1424
        %1434 = vrot.lane.b32.xlu0 %v142, 124
        %v1435 = vpop.permute.xlu0 %1434
        %1436 = vrot.lane.b32.xlu0 %v147, 124
        %v1437 = vpop.permute.xlu0 %1436
        %1438 = vrot.lane.b32.xlu0 %v152, 124
        %v1439 = vpop.permute.xlu0 %1438
        %1440 = vrot.lane.b32.xlu0 %v157, 124
        %v1441 = vpop.permute.xlu0 %1440
        %1442 = vrot.lane.b32.xlu0 %v162, 124
        %v1443 = vpop.permute.xlu0 %1442
        %1444 = vrot.lane.b32.xlu0 %v167, 124
        %v1445 = vpop.permute.xlu0 %1444
        %1446 = vrot.lane.b32.xlu0 %v172, 124
        %v1447 = vpop.permute.xlu0 %1446
        %1448 = vrot.lane.b32.xlu0 %v177, 124
        %v1449 = vpop.permute.xlu0 %1448
        %1458 = vrot.lane.b32.xlu0 %v142, 92
        %v1459 = vpop.permute.xlu0 %1458
        %1460 = vrot.lane.b32.xlu0 %v147, 92
        %v1461 = vpop.permute.xlu0 %1460
        %1462 = vrot.lane.b32.xlu0 %v152, 92
        %v1463 = vpop.permute.xlu0 %1462
        %1464 = vrot.lane.b32.xlu0 %v157, 92
        %v1465 = vpop.permute.xlu0 %1464
        %1466 = vrot.lane.b32.xlu0 %v162, 92
        %v1467 = vpop.permute.xlu0 %1466
        %1468 = vrot.lane.b32.xlu0 %v167, 92
        %v1469 = vpop.permute.xlu0 %1468
        %1470 = vrot.lane.b32.xlu0 %v172, 92
        %v1471 = vpop.permute.xlu0 %1470
        %1472 = vrot.lane.b32.xlu0 %v177, 92
        %v1473 = vpop.permute.xlu0 %1472
        %v1482 = vsel %vm419, %v1091, %v1339
        %v1483 = vsel %vm419, %v1093, %v1341
        %v1484 = vsel %vm419, %v1095, %v1343
        %v1485 = vsel %vm419, %v1097, %v1345
        %v1486 = vsel %vm419, %v1099, %v1347
        %v1487 = vsel %vm419, %v1101, %v1349
        %v1488 = vsel %vm419, %v1103, %v1351
        %v1489 = vsel %vm419, %v1105, %v1353
        %v1490 = vsel %vm437, %v1482, %v1363
        %v1491 = vsel %vm437, %v1483, %v1365
        %v1492 = vsel %vm437, %v1484, %v1367
        %v1493 = vsel %vm437, %v1485, %v1369
        %v1494 = vsel %vm437, %v1486, %v1371
        %v1495 = vsel %vm437, %v1487, %v1373
        %v1496 = vsel %vm437, %v1488, %v1375
        %v1497 = vsel %vm437, %v1489, %v1377
        %v1498 = vsel %vm446, %v1490, %v1387
        %v1499 = vsel %vm446, %v1491, %v1389
        %v1500 = vsel %vm446, %v1492, %v1391
        %v1501 = vsel %vm446, %v1493, %v1393
        %v1502 = vsel %vm446, %v1494, %v1395
        %v1503 = vsel %vm446, %v1495, %v1397
        %v1504 = vsel %vm446, %v1496, %v1399
        %v1505 = vsel %vm446, %v1497, %v1401
        %v1506 = vsel %vm455, %v1498, %v1411
        %v1507 = vsel %vm455, %v1499, %v1413
        %v1508 = vsel %vm455, %v1500, %v1415
        %v1509 = vsel %vm455, %v1501, %v1417
        %v1510 = vsel %vm455, %v1502, %v1419
        %v1511 = vsel %vm455, %v1503, %v1421
        %v1512 = vsel %vm455, %v1504, %v1423
        %v1513 = vsel %vm455, %v1505, %v1425
        %v1514 = vsel %vm464, %v1506, %v1435
        %v1515 = vsel %vm464, %v1507, %v1437
        %v1516 = vsel %vm464, %v1508, %v1439
        %v1517 = vsel %vm464, %v1509, %v1441
        %v1518 = vsel %vm464, %v1510, %v1443
        %v1519 = vsel %vm464, %v1511, %v1445
        %v1520 = vsel %vm464, %v1512, %v1447
        %v1521 = vsel %vm464, %v1513, %v1449
        %v1522 = vsel %vm473, %v1514, %v1459
        %v1523 = vsel %vm473, %v1515, %v1461
        %v1524 = vsel %vm473, %v1516, %v1463
        %v1525 = vsel %vm473, %v1517, %v1465
        %v1526 = vsel %vm473, %v1518, %v1467
        %v1527 = vsel %vm473, %v1519, %v1469
        %v1528 = vsel %vm473, %v1520, %v1471
        %v1529 = vsel %vm473, %v1521, %v1473
        %v1530 = vsel %vm895, %v1522, %v1179
        %v1531 = vsel %vm895, %v1523, %v1181
        %v1532 = vsel %vm895, %v1524, %v1183
        %v1533 = vsel %vm895, %v1525, %v1185
        %v1534 = vsel %vm895, %v1526, %v1187
        %v1535 = vsel %vm895, %v1527, %v1189
        %v1536 = vsel %vm895, %v1528, %v1191
        %v1537 = vsel %vm895, %v1529, %v1193
        %v1538 = vsel %vm482, %v1530, %v1339
        %v1539 = vsel %vm482, %v1531, %v1341
        %v1540 = vsel %vm482, %v1532, %v1343
        %v1541 = vsel %vm482, %v1533, %v1345
        %v1542 = vsel %vm482, %v1534, %v1347
        %v1543 = vsel %vm482, %v1535, %v1349
        %v1544 = vsel %vm482, %v1536, %v1351
        %v1545 = vsel %vm482, %v1537, %v1353
        %1562 = vrot.lane.b32.xlu0 %v928, 52
        %v1563 = vpop.permute.xlu0 %1562
        %1564 = vrot.lane.b32.xlu0 %v953, 52
        %v1565 = vpop.permute.xlu0 %1564
        %1566 = vrot.lane.b32.xlu0 %v929, 52
        %v1567 = vpop.permute.xlu0 %1566
        %1568 = vrot.lane.b32.xlu0 %v954, 52
        %v1569 = vpop.permute.xlu0 %1568
        %1570 = vrot.lane.b32.xlu0 %v930, 52
        %v1571 = vpop.permute.xlu0 %1570
        %1572 = vrot.lane.b32.xlu0 %v955, 52
        %v1573 = vpop.permute.xlu0 %1572
        %1574 = vrot.lane.b32.xlu0 %v931, 52
        %v1575 = vpop.permute.xlu0 %1574
        %1576 = vrot.lane.b32.xlu0 %v956, 52
        %v1577 = vpop.permute.xlu0 %1576
        %1578 = vrot.lane.b32.xlu0 %v932, 52
        %v1579 = vpop.permute.xlu0 %1578
        %1580 = vrot.lane.b32.xlu0 %v957, 52
        %v1581 = vpop.permute.xlu0 %1580
        %1582 = vrot.lane.b32.xlu0 %v933, 52
        %v1583 = vpop.permute.xlu0 %1582
        %1584 = vrot.lane.b32.xlu0 %v958, 52
        %v1585 = vpop.permute.xlu0 %1584
        %1586 = vrot.lane.b32.xlu0 %v934, 52
        %v1587 = vpop.permute.xlu0 %1586
        %1588 = vrot.lane.b32.xlu0 %v959, 52
        %v1589 = vpop.permute.xlu0 %1588
        %1590 = vrot.lane.b32.xlu0 %v935, 52
        %v1591 = vpop.permute.xlu0 %1590
        %1592 = vrot.lane.b32.xlu0 %v960, 52
        %v1593 = vpop.permute.xlu0 %1592
        %vm1594 = vcmask 424960
        %v1595 = vsel %vm1594, %v1563, %v1565
        %v1596 = vsel %vm1594, %v1567, %v1569
        %v1597 = vsel %vm1594, %v1571, %v1573
        %v1598 = vsel %vm1594, %v1575, %v1577
        %v1599 = vsel %vm1594, %v1579, %v1581
        %v1600 = vsel %vm1594, %v1583, %v1585
        %v1601 = vsel %vm1594, %v1587, %v1589
        %v1602 = vsel %vm1594, %v1591, %v1593
        %1635 = vrot.lane.b32.xlu0 %v1298, 104
        %v1636 = vpop.permute.xlu0 %1635
        %1637 = vrot.lane.b32.xlu0 %v1330, 104
        %v1638 = vpop.permute.xlu0 %1637
        %1639 = vrot.lane.b32.xlu0 %v1299, 104
        %v1640 = vpop.permute.xlu0 %1639
        %1641 = vrot.lane.b32.xlu0 %v1331, 104
        %v1642 = vpop.permute.xlu0 %1641
        %1643 = vrot.lane.b32.xlu0 %v1300, 104
        %v1644 = vpop.permute.xlu0 %1643
        %1645 = vrot.lane.b32.xlu0 %v1332, 104
        %v1646 = vpop.permute.xlu0 %1645
        %1647 = vrot.lane.b32.xlu0 %v1301, 104
        %v1648 = vpop.permute.xlu0 %1647
        %1649 = vrot.lane.b32.xlu0 %v1333, 104
        %v1650 = vpop.permute.xlu0 %1649
        %1651 = vrot.lane.b32.xlu0 %v1302, 104
        %v1652 = vpop.permute.xlu0 %1651
        %1653 = vrot.lane.b32.xlu0 %v1334, 104
        %v1654 = vpop.permute.xlu0 %1653
        %1655 = vrot.lane.b32.xlu0 %v1303, 104
        %v1656 = vpop.permute.xlu0 %1655
        %1657 = vrot.lane.b32.xlu0 %v1335, 104
        %v1658 = vpop.permute.xlu0 %1657
        %1659 = vrot.lane.b32.xlu0 %v1304, 104
        %v1660 = vpop.permute.xlu0 %1659
        %1661 = vrot.lane.b32.xlu0 %v1336, 104
        %v1662 = vpop.permute.xlu0 %1661
        %1663 = vrot.lane.b32.xlu0 %v1305, 104
        %v1664 = vpop.permute.xlu0 %1663
        %1665 = vrot.lane.b32.xlu0 %v1337, 104
        %v1666 = vpop.permute.xlu0 %1665
        %vm1667 = vcmask 850944
        %v1668 = vsel %vm1667, %v1636, %v1638
        %v1669 = vsel %vm1667, %v1640, %v1642
        %v1670 = vsel %vm1667, %v1644, %v1646
        %v1671 = vsel %vm1667, %v1648, %v1650
        %v1672 = vsel %vm1667, %v1652, %v1654
        %v1673 = vsel %vm1667, %v1656, %v1658
        %v1674 = vsel %vm1667, %v1660, %v1662
        %v1675 = vsel %vm1667, %v1664, %v1666
        %1708 = vrot.lane.b32.xlu0 %v1538, 28
        %v1709 = vpop.permute.xlu0 %1708
        %1710 = vrot.lane.b32.xlu0 %v1539, 28
        %v1711 = vpop.permute.xlu0 %1710
        %1712 = vrot.lane.b32.xlu0 %v1540, 28
        %v1713 = vpop.permute.xlu0 %1712
        %1714 = vrot.lane.b32.xlu0 %v1541, 28
        %v1715 = vpop.permute.xlu0 %1714
        %1716 = vrot.lane.b32.xlu0 %v1542, 28
        %v1717 = vpop.permute.xlu0 %1716
        %1718 = vrot.lane.b32.xlu0 %v1543, 28
        %v1719 = vpop.permute.xlu0 %1718
        %1720 = vrot.lane.b32.xlu0 %v1544, 28
        %v1721 = vpop.permute.xlu0 %1720
        %1722 = vrot.lane.b32.xlu0 %v1545, 28
        %v1723 = vpop.permute.xlu0 %1722
        %v1732 = vsel %vm1594, %v535, %v1563
        %v1733 = vsel %vm1594, %v536, %v1567
        %v1734 = vsel %vm1594, %v537, %v1571
        %v1735 = vsel %vm1594, %v538, %v1575
        %v1736 = vsel %vm1594, %v539, %v1579
        %v1737 = vsel %vm1594, %v540, %v1583
        %v1738 = vsel %vm1594, %v541, %v1587
        %v1739 = vsel %vm1594, %v542, %v1591
        %v1740 = vsel %vm1667, %v1595, %v1636
        %v1741 = vsel %vm1667, %v1596, %v1640
        %v1742 = vsel %vm1667, %v1597, %v1644
        %v1743 = vsel %vm1667, %v1598, %v1648
        %v1744 = vsel %vm1667, %v1599, %v1652
        %v1745 = vsel %vm1667, %v1600, %v1656
        %v1746 = vsel %vm1667, %v1601, %v1660
        %v1747 = vsel %vm1667, %v1602, %v1664
        %v1748 = vsel %vm437, %v1638, %v1709
        %v1749 = vsel %vm437, %v1642, %v1711
        %v1750 = vsel %vm437, %v1646, %v1713
        %v1751 = vsel %vm437, %v1650, %v1715
        %v1752 = vsel %vm437, %v1654, %v1717
        %v1753 = vsel %vm437, %v1658, %v1719
        %v1754 = vsel %vm437, %v1662, %v1721
        %v1755 = vsel %vm437, %v1666, %v1723
        %1756 = vst [vmem:[%s135] sm:$0xff] %v510
        %1757 = vst [vmem:[%s135 + $0x8] sm:$0xff] %v1732
        %1758 = vst [vmem:[%s135 + $0x10] sm:$0xff] %v1740
        %1759 = vst [vmem:[%s135 + $0x18] sm:$0xff] %v1668
        %1760 = vst [vmem:[%s135 + $0x20] sm:$0xff] %v1748
        %1761 = vst [vmem:[%s135 + $0x28] sm:$0xff] %v511
        %1762 = vst [vmem:[%s135 + $0x30] sm:$0xff] %v1733
        %1763 = vst [vmem:[%s135 + $0x38] sm:$0xff] %v1741
        %1764 = vst [vmem:[%s135 + $0x40] sm:$0xff] %v1669
        %1765 = vst [vmem:[%s135 + $0x48] sm:$0xff] %v1749
        %1766 = vst [vmem:[%s135 + $0x50] sm:$0xff] %v512
        %1767 = vst [vmem:[%s135 + $0x58] sm:$0xff] %v1734
        %1768 = vst [vmem:[%s135 + $0x60] sm:$0xff] %v1742
        %1769 = vst [vmem:[%s135 + $0x68] sm:$0xff] %v1670
        %1770 = vst [vmem:[%s135 + $0x70] sm:$0xff] %v1750
        %1771 = vst [vmem:[%s135 + $0x78] sm:$0xff] %v513
        %1772 = vst [vmem:[%s135 + $0x80] sm:$0xff] %v1735
        %1773 = vst [vmem:[%s135 + $0x88] sm:$0xff] %v1743
        %1774 = vst [vmem:[%s135 + $0x90] sm:$0xff] %v1671
        %1775 = vst [vmem:[%s135 + $0x98] sm:$0xff] %v1751
        %1776 = vst [vmem:[%s135 + $0xa0] sm:$0xff] %v514
        %1777 = vst [vmem:[%s135 + $0xa8] sm:$0xff] %v1736
        %1778 = vst [vmem:[%s135 + $0xb0] sm:$0xff] %v1744
        %1779 = vst [vmem:[%s135 + $0xb8] sm:$0xff] %v1672
        %1780 = vst [vmem:[%s135 + $0xc0] sm:$0xff] %v1752
        %1781 = vst [vmem:[%s135 + $0xc8] sm:$0xff] %v515
        %1782 = vst [vmem:[%s135 + $0xd0] sm:$0xff] %v1737
        %1783 = vst [vmem:[%s135 + $0xd8] sm:$0xff] %v1745
        %1784 = vst [vmem:[%s135 + $0xe0] sm:$0xff] %v1673
        %1785 = vst [vmem:[%s135 + $0xe8] sm:$0xff] %v1753
        %1786 = vst [vmem:[%s135 + $0xf0] sm:$0xff] %v516
        %1787 = vst [vmem:[%s135 + $0xf8] sm:$0xff] %v1738
        %1788 = vst [vmem:[%s135 + $0x100] sm:$0xff] %v1746
        %1789 = vst [vmem:[%s135 + $0x108] sm:$0xff] %v1674
        %1790 = vst [vmem:[%s135 + $0x110] sm:$0xff] %v1754
        %1791 = vst [vmem:[%s135 + $0x118] sm:$0xff] %v517
        %1792 = vst [vmem:[%s135 + $0x120] sm:$0xff] %v1739
        %1793 = vst [vmem:[%s135 + $0x128] sm:$0xff] %v1747
        %1794 = vst [vmem:[%s135 + $0x130] sm:$0xff] %v1675
        %1795 = vst [vmem:[%s135 + $0x138] sm:$0xff] %v1755
        %s1796 = sand.u32 %s52, 1
        %s1797 = scalar_lea.sflag [#allocation4], %s1796
        %s1798 = sand.u32 %s52, 1
        %s1799 = smul.addr %s1798, 320
        %s1800 = scalar_lea.vmem [#allocation5], %s1799
        // Predicated region
        $region29: #{tpu_custom_call.1} parent=23 // pred_check
          %p1801 = pneg %p62
        $region30: #{tpu_custom_call.1} parent=23 // pred_check_branch
          %1803 = sbr.rel (%p1801) target = $region32
        $region31: #{tpu_custom_call.1} parent=23 // pred_region
          %s1804 = smul.u32 8, %s18
          %s1806 = ssub.s32 5120, 5120
          %1807 = vsyncadd %s1797, %s1806
          %s1808 = smul.addr %s1804, 5
          %s1809 = smul.addr %s1808, 128
          %s1810 = scalar_lea.hbm %s1, %s1809
          %s1811 = sshll.u32 %s1800, 4
          %s1812 = int_to_ptr.vmem [resolvable:$true] %s1811
          %1817 = dma.vmem_to_hbm [thread:$0]  %s1812, 5120, %s1810, %s1797, 640, 640, 40
        $region32: #{tpu_custom_call.1} parent=23 // pred_fallthru
          _
      $region24: #{tpu_custom_call.1} parent=5 // pred_fallthru
        _
      %p1818 = scmp.le.s32.totalorder 2, %s13
      // Predicated region
      $region33: #{tpu_custom_call.1} parent=5 // pred_check
        %p1819 = pneg %p1818
      $region34: #{tpu_custom_call.1} parent=5 // pred_check_branch
        %1821 = sbr.rel (%p1819) target = $region36
      $region35: #{tpu_custom_call.1} parent=5 // pred_region
        %s1822 = ssub.s32 %s13, 2
        // Predicated region
        $region37: #{tpu_custom_call.1} parent=35 // pred_check
          %p1823 = pneg %p68
        $region38: #{tpu_custom_call.1} parent=35 // pred_check_branch
          %1825 = sbr.rel (%p1823) target = $region40
        $region39: #{tpu_custom_call.1} parent=35 // pred_region
          %s1826 = sand.u32 %s53, 1
          %s1827 = scalar_lea.sflag [#allocation4], %s1826
          %s1828 = sand.u32 %s53, 1
          %s1829 = smul.addr %s1828, 320
          %s1830 = scalar_lea.vmem [#allocation5], %s1829
          %1831 = dma.done %s1827, 5120
        $region40: #{tpu_custom_call.1} parent=35 // pred_fallthru
          _
      $region36: #{tpu_custom_call.1} parent=5 // pred_fallthru
        _
    $region6: #{tpu_custom_call.1} parent=1 // loop_footer
      %s17 = sadd.s32 1, %s13
    $region7: #{tpu_custom_call.1} parent=1 // loop_footer_branch
      %12 = sbr.rel target = $region3
    $region8: #{tpu_custom_call.1} parent=1 // loop_exit
      _
    %1832 = vsyncpa [#allocation3], 1
    %s1833 = scalar_lea.sflag [#allocation3], 1
    %1834 = vsyncpa %s1833, 1
    %1835 = vsyncpa [#allocation4], 1
    %s1836 = scalar_lea.sflag [#allocation4], 1
    %1837 = vsyncpa %s1836, 1

</llo_original>
